<compile_context>
chip_gen: v7x
topology: tpu7x:2x2x1
jax: 0.10.0
libtpu: 0.0.40
codegen_flags: <defaults>
</compile_context>

<pallas_src>
import functools

import jax
import jax.numpy as jnp
from jax.experimental import pallas as pl
from jax.experimental.pallas import tpu as pltpu

_LANE = 128
_SUBLANE_BF16 = 16     # bf16 packing: sublane granularity for q tiles
_TM_TARGET = 256       # target rows per M tile (amortizes ~0.35us/step)
_VMEM_LIMIT = 32 * 1024 * 1024


def _round_up(x, m):
    return ((x + m - 1) // m) * m


# ----------------------------------------------------------------------------
# Kernel 1: 1x1 conv + BatchNorm for q and (pre-transposed) k.  Single launch.
# ----------------------------------------------------------------------------
def _qk_proj_bn_kernel(cent_ref, featT_ref, wq_ref, wk_ref,
                       gq_ref, bq_ref, gk_ref, bk_ref,
                       q_ref, kT_ref, *,
                       q_count, k_count, q_pad_rows, k_pad_cols):
    # cent_ref : [B*Mpad, Cin_p]   featT_ref: [Cin_p, B*Npad]
    # wq_ref   : [Cin_p, Hp]       wk_ref   : [Hp, Cin_p]
    # gq/bq    : [1, Hp]           gk/bk    : [Hp, 1]
    # q_ref    : [B*Mpad, Hp] bf16 kT_ref   : [Hp, B*Npad] bf16
    eps = jnp.float32(1e-5)

    # ---- q path: rows = positions, BN over B*M real rows (pad rows are 0) ---
    yq = jnp.dot(cent_ref[...], wq_ref[...], preferred_element_type=jnp.float32)
    inv_q = jnp.float32(1.0 / q_count)
    mean_q = jnp.sum(yq, axis=0, keepdims=True) * inv_q
    dq = yq - mean_q
    # Each all-zero pad row contributes exactly mean^2 to sum(dq^2); subtract
    # it analytically -> exact two-pass variance over the real rows.
    var_q = (jnp.sum(dq * dq, axis=0, keepdims=True)
             - jnp.float32(q_pad_rows) * mean_q * mean_q) * inv_q
    scale_q = gq_ref[...] * jax.lax.rsqrt(jnp.maximum(var_q, 0.0) + eps)
    shift_q = bq_ref[...] - mean_q * scale_q
    q_ref[...] = (yq * scale_q + shift_q).astype(q_ref.dtype)

    # ---- k path, produced transposed: kT = Wk @ feat^T, lanes = positions ---
    yk = jnp.dot(wk_ref[...], featT_ref[...], preferred_element_type=jnp.float32)
    inv_k = jnp.float32(1.0 / k_count)
    mean_k = jnp.sum(yk, axis=1, keepdims=True) * inv_k
    dk = yk - mean_k
    var_k = (jnp.sum(dk * dk, axis=1, keepdims=True)
             - jnp.float32(k_pad_cols) * mean_k * mean_k) * inv_k
    scale_k = gk_ref[...] * jax.lax.rsqrt(jnp.maximum(var_k, 0.0) + eps)
    shift_k = bk_ref[...] - mean_k * scale_k
    kT_ref[...] = (yk * scale_k + shift_k).astype(kT_ref.dtype)


# ----------------------------------------------------------------------------
# Kernel 2: per-(batch, M-tile) scores + softmax + sqrt-mix; accumulate the
#           dim=1 (over M) L1 denominator across the "arbitrary" M axis.
# ----------------------------------------------------------------------------
def _attn_pass1_kernel(q_ref, kT_ref, mask_ref, adj_ref, colsum_ref,
                       *, valid_n, valid_m, m_padded):
    # q_ref:   [tm, Hp] bf16     kT_ref: [Hp, Npad] bf16
    # mask_ref/adj_ref: [1, tm, Npad] f32   colsum_ref: [1, 1, Npad] f32
    mi = pl.program_id(1)
    _, tm, n_pad = mask_ref.shape

    m_t = mask_ref[0]                                          # [tm, Npad]

    # bf16 MXU matmul, f32 accumulation (RHS already transposed & lane-dense).
    s = jnp.dot(q_ref[...], kT_ref[...], preferred_element_type=jnp.float32)

    # masked_fill(mask < 1e-9, -1e9)
    s = jnp.where(m_t < 1e-9, jnp.float32(-1e9), s)

    col_ok = None
    if valid_n != n_pad:
        # Pad columns -> -inf so they are exactly 0 after exp even when every
        # real column of a row is masked (torch then gives uniform 1/N).
        col_ok = jax.lax.broadcasted_iota(jnp.int32, (tm, n_pad), 1) < valid_n
        s = jnp.where(col_ok, s, -jnp.inf)

    # Softmax over the last dim (EUP exp; approx reciprocal rides the EUP slot).
    mx = jnp.max(s, axis=-1, keepdims=True)
    e = jnp.exp(s - mx)
    p = e * pl.reciprocal(jnp.sum(e, axis=-1, keepdims=True), approx=True)

    # sqrt(mask+1e-9)*sqrt(p+1e-9) - 1e-9, fused into a single sqrt
    # (operands strictly positive -> mathematically identical, ~30% less EUP).
    adj = jnp.sqrt((m_t + jnp.float32(1e-9)) * (p + jnp.float32(1e-9))) \
        - jnp.float32(1e-9)

    # Force pad rows / pad columns to exact zero so they contribute nothing to
    # either L1 normalization.
    ok = col_ok
    if valid_m != m_padded:
        row_ok = (mi * tm + jax.lax.broadcasted_iota(jnp.int32, (tm, n_pad), 0)
                  ) < valid_m
        ok = row_ok if ok is None else (ok & row_ok)
    if ok is not None:
        adj = jnp.where(ok, adj, jnp.float32(0.0))

    adj_ref[0] = adj

    # Column sums (dim=1 L1 denominator): the [1,1,Npad] output block keeps the
    # same index across the trailing M grid axis -> stays VMEM-resident.
    @pl.when(mi == 0)
    def _():
        colsum_ref[...] = jnp.zeros_like(colsum_ref)
    colsum_ref[...] += jnp.sum(adj, axis=0, keepdims=True)[None]


# ----------------------------------------------------------------------------
# Kernel 3: apply dim=1 then dim=-1 L1 normalizations (exact divides).
# ----------------------------------------------------------------------------
def _attn_pass2_kernel(adj_ref, colsum_ref, o_ref):
    adj = adj_ref[0]                                           # [tm, Npad]
    col = jnp.maximum(colsum_ref[0], jnp.float32(1e-12))       # [1, Npad]
    adj = adj / col                                            # F.normalize dim=1
    row = jnp.maximum(jnp.sum(adj, axis=-1, keepdims=True), jnp.float32(1e-12))
    o_ref[0] = adj / row                                       # F.normalize dim=-1


# ----------------------------------------------------------------------------
# Wrapper: padding / layout plumbing + the three pallas_calls.
# ----------------------------------------------------------------------------
@jax.jit
def masked_attention_forward(params, cent_feat, feat, mask):
    """cent_feat: [B, M, Cin], feat: [B, N, Cin], mask: [B, M, N] -> [B, M, N]."""
    B, M, Cin = cent_feat.shape
    N = feat.shape[1]
    H = params["wq_t"].shape[1]

    cin_p = _round_up(max(Cin, 8), 8)
    h_p = _round_up(max(H, _LANE), _LANE)
    n_pad = _round_up(max(N, _LANE), _LANE)

    # M tile: as big as possible, but double-buffered mask+adj tiles must fit
    # the explicit scoped-VMEM limit on every generation.
    tm = _TM_TARGET
    while tm > _SUBLANE_BF16 and 6 * tm * n_pad * 4 > (24 << 20):
        tm //= 2
    if M <= tm:
        m_pad = _round_up(max(M, _SUBLANE_BF16), _SUBLANE_BF16)
        tm = m_pad
    else:
        m_pad = _round_up(M, tm)
    grid_m = m_pad // tm

    # --- zero padding (pure layout plumbing; exactness handled in-kernel) ----
    cent_flat = jnp.pad(cent_feat, ((0, 0), (0, m_pad - M), (0, cin_p - Cin))
                        ).reshape(B * m_pad, cin_p)
    featT = jnp.pad(feat, ((0, 0), (0, n_pad - N), (0, cin_p - Cin))
                    ).transpose(2, 0, 1).reshape(cin_p, B * n_pad)
    mask_p = jnp.pad(mask, ((0, 0), (0, m_pad - M), (0, n_pad - N)))

    wq_t = jnp.pad(params["wq_t"], ((0, cin_p - Cin), (0, h_p - H)))
    wk = jnp.pad(params["wk"], ((0, h_p - H), (0, cin_p - Cin)))
    gq = jnp.pad(params["gq"], (0, h_p - H)).reshape(1, h_p)
    bq = jnp.pad(params["bq"], (0, h_p - H)).reshape(1, h_p)
    gk = jnp.pad(params["gk"], (0, h_p - H)).reshape(h_p, 1)
    bk = jnp.pad(params["bk"], (0, h_p - H)).reshape(h_p, 1)

    # --- kernel 1: conv + BN for q and (pre-transposed) k --------------------
    q_bf, kT_bf = pl.pallas_call(
        functools.partial(
            _qk_proj_bn_kernel,
            q_count=B * M, k_count=B * N,
            q_pad_rows=B * (m_pad - M), k_pad_cols=B * (n_pad - N)),
        out_shape=(jax.ShapeDtypeStruct((B * m_pad, h_p), jnp.bfloat16),
                   jax.ShapeDtypeStruct((h_p, B * n_pad), jnp.bfloat16)),
    )(cent_flat, featT, wq_t, wk, gq, bq, gk, bk)

    # --- kernel 2: masked attention + sqrt-mix + column-sum accumulation -----
    adj_pre, colsum = pl.pallas_call(
        functools.partial(_attn_pass1_kernel,
                          valid_n=N, valid_m=M, m_padded=m_pad),
        out_shape=(jax.ShapeDtypeStruct((B, m_pad, n_pad), jnp.float32),
                   jax.ShapeDtypeStruct((B, 1, n_pad), jnp.float32)),
        grid=(B, grid_m),
        in_specs=[
            pl.BlockSpec((tm, h_p), lambda b, mi: (b * grid_m + mi, 0)),
            pl.BlockSpec((h_p, n_pad), lambda b, mi: (0, b)),
            pl.BlockSpec((1, tm, n_pad), lambda b, mi: (b, mi, 0)),
        ],
        out_specs=(
            pl.BlockSpec((1, tm, n_pad), lambda b, mi: (b, mi, 0)),
            pl.BlockSpec((1, 1, n_pad), lambda b, mi: (b, 0, 0)),
        ),
        compiler_params=pltpu.CompilerParams(
            dimension_semantics=("parallel", "arbitrary"),
            vmem_limit_bytes=_VMEM_LIMIT),
    )(q_bf, kT_bf, mask_p)

    # --- kernel 3: the two L1 normalizations ----------------------------------
    out = pl.pallas_call(
        _attn_pass2_kernel,
        out_shape=jax.ShapeDtypeStruct((B, m_pad, n_pad), jnp.float32),
        grid=(B, grid_m),
        in_specs=[
            pl.BlockSpec((1, tm, n_pad), lambda b, mi: (b, mi, 0)),
            pl.BlockSpec((1, 1, n_pad), lambda b, mi: (b, 0, 0)),
        ],
        out_specs=pl.BlockSpec((1, tm, n_pad), lambda b, mi: (b, mi, 0)),
        compiler_params=pltpu.CompilerParams(
            dimension_semantics=("parallel", "parallel"),
            vmem_limit_bytes=_VMEM_LIMIT),
    )(adj_pre, colsum)

    return out[:, :M, :N]


# ----------------------------------------------------------------------------
# Parameter init (matches the PyTorch module's defaults)
# ----------------------------------------------------------------------------
def init_params(key, in_channels, hid_channels):
    cin = in_channels + 3
    # Xavier-normal for Conv1d weight [H, Cin, 1]: std = sqrt(2 / (Cin + H)).
    std = (2.0 / (cin + hid_channels)) ** 0.5
    kq, kk = jax.random.split(key)
    wq = jax.random.normal(kq, (hid_channels, cin), jnp.float32) * std
    wk = jax.random.normal(kk, (hid_channels, cin), jnp.float32) * std
    h = hid_channels
    return {
        "wq_t": wq.T,                 # [Cin, H]  (q = x @ wq_t)
        "wk": wk,                     # [H, Cin]  (kT = wk @ x^T)
        "gq": jnp.ones((h,), jnp.float32), "bq": jnp.zeros((h,), jnp.float32),
        "gk": jnp.ones((h,), jnp.float32), "bk": jnp.zeros((h,), jnp.float32),
    }


# ----------------------------------------------------------------------------
# Pure-JAX f32 reference (non-Pallas) for a correctness sanity check
# ----------------------------------------------------------------------------
def reference_forward(params, cent_feat, feat, mask):
    def bn(y, g, b):
        yf = y.reshape(-1, y.shape[-1])
        mean = jnp.mean(yf, axis=0)
        var = jnp.mean((yf - mean) ** 2, axis=0)
        return (y - mean) * jax.lax.rsqrt(var + 1e-5) * g + b

    q = bn(jnp.einsum("bmc,ch->bmh", cent_feat, params["wq_t"]),
           params["gq"], params["bq"])
    k = bn(jnp.einsum("bnc,hc->bnh", feat, params["wk"]),
           params["gk"], params["bk"])
    adj = jnp.einsum("bmh,bnh->bmn", q, k)
    adj = jnp.where(mask < 1e-9, -1e9, adj)
    adj = jax.nn.softmax(adj, axis=-1)
    adj = jnp.sqrt(mask + 1e-9) * jnp.sqrt(adj + 1e-9) - 1e-9
    adj = adj / jnp.maximum(jnp.sum(jnp.abs(adj), axis=1, keepdims=True), 1e-12)
    adj = adj / jnp.maximum(jnp.sum(jnp.abs(adj), axis=-1, keepdims=True), 1e-12)
    return adj


if __name__ == "__main__":
    B, M, N = 2, 8, 16
    in_channels, hid_channels = 4, 32
    cin = in_channels + 3  # 7

    key = jax.random.PRNGKey(0)
    kp, k1, k2, k3 = jax.random.split(key, 4)

    params = init_params(kp, in_channels, hid_channels)
    cent_feat = jax.random.normal(k1, (B, M, cin), jnp.float32)
    feat = jax.random.normal(k2, (B, N, cin), jnp.float32)
    mask = (jax.random.uniform(k3, (B, M, N)) > 0.3).astype(jnp.float32)

    adj = masked_attention_forward(params, cent_feat, feat, mask)
    jax.block_until_ready(adj)

    assert adj.shape == (B, M, N)
    assert bool(jnp.all(jnp.isfinite(adj)))

    # Sanity check vs. pure-JAX f32 reference.  Tolerance leaves slack for the
    # bf16 score matmul and the EUP approx reciprocal in the softmax.
    ref = reference_forward(params, cent_feat, feat, mask)
    max_err = float(jnp.max(jnp.abs(adj - ref)))
    assert bool(jnp.allclose(adj, ref, rtol=5e-2, atol=5e-3)), max_err

    print("KERNEL_OK")
</pallas_src>

<mosaic_0001>
module attributes {stable_mosaic.version = 11 : i64} {
  func.func @_qk_proj_bn_kernel(%arg0: memref<32x8xf32, #tpu.memory_space<vmem>>, %arg1: memref<8x256xf32, #tpu.memory_space<vmem>>, %arg2: memref<8x128xf32, #tpu.memory_space<vmem>>, %arg3: memref<128x8xf32, #tpu.memory_space<vmem>>, %arg4: memref<1x128xf32, #tpu.memory_space<vmem>>, %arg5: memref<1x128xf32, #tpu.memory_space<vmem>>, %arg6: memref<128x1xf32, #tpu.memory_space<vmem>>, %arg7: memref<128x1xf32, #tpu.memory_space<vmem>>, %arg8: memref<32x128xbf16, #tpu.memory_space<vmem>>, %arg9: memref<128x256xbf16, #tpu.memory_space<vmem>>) attributes {dimension_semantics = [], scalar_prefetch = 0 : i64, scratch_operands = 0 : i64, tpu.core_type = #tpu.core_type<tc>} {
    %c0 = arith.constant 0 : index
    %c0_0 = arith.constant 0 : index
    %0 = vector.load %arg0[%c0, %c0_0] : memref<32x8xf32, #tpu.memory_space<vmem>>, vector<32x8xf32>
    %c0_1 = arith.constant 0 : index
    %c0_2 = arith.constant 0 : index
    %1 = vector.load %arg2[%c0_1, %c0_2] : memref<8x128xf32, #tpu.memory_space<vmem>>, vector<8x128xf32>
    %cst = arith.constant dense<0.000000e+00> : vector<32x128xf32>
    %2 = tpu.matmul %0, %1, %cst {dimension_numbers = #tpu.dot_dimension_numbers<[1], [0], [0], [1], [0, 0, 1, 1], [], []>} : vector<32x8xf32>, vector<8x128xf32>, vector<32x128xf32> -> vector<32x128xf32>
    %cst_3 = arith.constant dense<0.000000e+00> : vector<128xf32>
    %3 = vector.multi_reduction <add>, %2, %cst_3 [0] : vector<32x128xf32> to vector<128xf32>
    %4 = vector.shape_cast %3 : vector<128xf32> to vector<1x128xf32>
    %cst_4 = arith.constant 6.250000e-02 : f32
    %5 = vector.broadcast %cst_4 : f32 to vector<1x128xf32>
    %6 = arith.mulf %4, %5 : vector<1x128xf32>
    %7 = vector.broadcast %6 : vector<1x128xf32> to vector<32x128xf32>
    %8 = arith.subf %2, %7 : vector<32x128xf32>
    %9 = arith.mulf %8, %8 : vector<32x128xf32>
    %cst_5 = arith.constant dense<0.000000e+00> : vector<128xf32>
    %10 = vector.multi_reduction <add>, %9, %cst_5 [0] : vector<32x128xf32> to vector<128xf32>
    %11 = vector.shape_cast %10 : vector<128xf32> to vector<1x128xf32>
    %cst_6 = arith.constant 1.600000e+01 : f32
    %12 = vector.broadcast %cst_6 : f32 to vector<1x128xf32>
    %13 = arith.mulf %12, %6 : vector<1x128xf32>
    %14 = arith.mulf %13, %6 : vector<1x128xf32>
    %15 = arith.subf %11, %14 : vector<1x128xf32>
    %cst_7 = arith.constant 6.250000e-02 : f32
    %16 = vector.broadcast %cst_7 : f32 to vector<1x128xf32>
    %17 = arith.mulf %15, %16 : vector<1x128xf32>
    %c0_8 = arith.constant 0 : index
    %c0_9 = arith.constant 0 : index
    %18 = vector.load %arg4[%c0_8, %c0_9] : memref<1x128xf32, #tpu.memory_space<vmem>>, vector<1x128xf32>
    %cst_10 = arith.constant 0.000000e+00 : f32
    %19 = vector.broadcast %cst_10 : f32 to vector<1x128xf32>
    %20 = arith.maximumf %17, %19 : vector<1x128xf32>
    %cst_11 = arith.constant 9.99999974E-6 : f32
    %21 = vector.broadcast %cst_11 : f32 to vector<1x128xf32>
    %22 = arith.addf %20, %21 : vector<1x128xf32>
    %23 = math.rsqrt %22 : vector<1x128xf32>
    %24 = arith.mulf %18, %23 : vector<1x128xf32>
    %c0_12 = arith.constant 0 : index
    %c0_13 = arith.constant 0 : index
    %25 = vector.load %arg5[%c0_12, %c0_13] : memref<1x128xf32, #tpu.memory_space<vmem>>, vector<1x128xf32>
    %26 = arith.mulf %6, %24 : vector<1x128xf32>
    %27 = arith.subf %25, %26 : vector<1x128xf32>
    %28 = vector.broadcast %24 : vector<1x128xf32> to vector<32x128xf32>
    %29 = arith.mulf %2, %28 : vector<32x128xf32>
    %30 = vector.broadcast %27 : vector<1x128xf32> to vector<32x128xf32>
    %31 = arith.addf %29, %30 : vector<32x128xf32>
    %32 = arith.truncf %31 : vector<32x128xf32> to vector<32x128xbf16>
    %c0_14 = arith.constant 0 : index
    %c0_15 = arith.constant 0 : index
    %33 = vector.load %arg8[%c0_14, %c0_15] : memref<32x128xbf16, #tpu.memory_space<vmem>>, vector<32x128xbf16>
    tpu.vector_store %arg8[%c0_14, %c0_15], %32 {strides = array<i32>} : memref<32x128xbf16, #tpu.memory_space<vmem>>, vector<32x128xbf16>,
    %c0_16 = arith.constant 0 : index
    %c0_17 = arith.constant 0 : index
    %34 = vector.load %arg3[%c0_16, %c0_17] : memref<128x8xf32, #tpu.memory_space<vmem>>, vector<128x8xf32>
    %c0_18 = arith.constant 0 : index
    %c0_19 = arith.constant 0 : index
    %35 = vector.load %arg1[%c0_18, %c0_19] : memref<8x256xf32, #tpu.memory_space<vmem>>, vector<8x256xf32>
    %cst_20 = arith.constant dense<0.000000e+00> : vector<128x256xf32>
    %36 = tpu.matmul %34, %35, %cst_20 {dimension_numbers = #tpu.dot_dimension_numbers<[1], [0], [0], [1], [0, 0, 1, 1], [], []>} : vector<128x8xf32>, vector<8x256xf32>, vector<128x256xf32> -> vector<128x256xf32>
    %cst_21 = arith.constant dense<0.000000e+00> : vector<128xf32>
    %37 = vector.multi_reduction <add>, %36, %cst_21 [1] : vector<128x256xf32> to vector<128xf32>
    %38 = vector.shape_cast %37 : vector<128xf32> to vector<128x1xf32>
    %cst_22 = arith.constant 3.125000e-02 : f32
    %39 = vector.broadcast %cst_22 : f32 to vector<128x1xf32>
    %40 = arith.mulf %38, %39 : vector<128x1xf32>
    %41 = vector.broadcast %40 : vector<128x1xf32> to vector<128x256xf32>
    %42 = arith.subf %36, %41 : vector<128x256xf32>
    %43 = arith.mulf %42, %42 : vector<128x256xf32>
    %cst_23 = arith.constant dense<0.000000e+00> : vector<128xf32>
    %44 = vector.multi_reduction <add>, %43, %cst_23 [1] : vector<128x256xf32> to vector<128xf32>
    %45 = vector.shape_cast %44 : vector<128xf32> to vector<128x1xf32>
    %cst_24 = arith.constant 2.240000e+02 : f32
    %46 = vector.broadcast %cst_24 : f32 to vector<128x1xf32>
    %47 = arith.mulf %46, %40 : vector<128x1xf32>
    %48 = arith.mulf %47, %40 : vector<128x1xf32>
    %49 = arith.subf %45, %48 : vector<128x1xf32>
    %cst_25 = arith.constant 3.125000e-02 : f32
    %50 = vector.broadcast %cst_25 : f32 to vector<128x1xf32>
    %51 = arith.mulf %49, %50 : vector<128x1xf32>
    %c0_26 = arith.constant 0 : index
    %c0_27 = arith.constant 0 : index
    %52 = vector.load %arg6[%c0_26, %c0_27] : memref<128x1xf32, #tpu.memory_space<vmem>>, vector<128x1xf32>
    %cst_28 = arith.constant 0.000000e+00 : f32
    %53 = vector.broadcast %cst_28 : f32 to vector<128x1xf32>
    %54 = arith.maximumf %51, %53 : vector<128x1xf32>
    %cst_29 = arith.constant 9.99999974E-6 : f32
    %55 = vector.broadcast %cst_29 : f32 to vector<128x1xf32>
    %56 = arith.addf %54, %55 : vector<128x1xf32>
    %57 = math.rsqrt %56 : vector<128x1xf32>
    %58 = arith.mulf %52, %57 : vector<128x1xf32>
    %c0_30 = arith.constant 0 : index
    %c0_31 = arith.constant 0 : index
    %59 = vector.load %arg7[%c0_30, %c0_31] : memref<128x1xf32, #tpu.memory_space<vmem>>, vector<128x1xf32>
    %60 = arith.mulf %40, %58 : vector<128x1xf32>
    %61 = arith.subf %59, %60 : vector<128x1xf32>
    %62 = vector.broadcast %58 : vector<128x1xf32> to vector<128x256xf32>
    %63 = arith.mulf %36, %62 : vector<128x256xf32>
    %64 = vector.broadcast %61 : vector<128x1xf32> to vector<128x256xf32>
    %65 = arith.addf %63, %64 : vector<128x256xf32>
    %66 = arith.truncf %65 : vector<128x256xf32> to vector<128x256xbf16>
    %c0_32 = arith.constant 0 : index
    %c0_33 = arith.constant 0 : index
    %67 = vector.load %arg9[%c0_32, %c0_33] : memref<128x256xbf16, #tpu.memory_space<vmem>>, vector<128x256xbf16>
    tpu.vector_store %arg9[%c0_32, %c0_33], %66 {strides = array<i32>} : memref<128x256xbf16, #tpu.memory_space<vmem>>, vector<128x256xbf16>,
    return
  }
}

module attributes {stable_mosaic.version = 11 : i64} {
  func.func @_attn_pass2_kernel(%arg0: i32, %arg1: i32, %arg2: memref<1x16x128xf32, #tpu.memory_space<vmem>>, %arg3: memref<1x1x128xf32, #tpu.memory_space<vmem>>, %arg4: memref<1x16x128xf32, #tpu.memory_space<vmem>>) attributes {dimension_semantics = [#tpu.dimension_semantics<parallel>, #tpu.dimension_semantics<parallel>], iteration_bounds = array<i64: 2, 1>, scalar_prefetch = 0 : i64, scratch_operands = 0 : i64, tpu.core_type = #tpu.core_type<tc>, window_params = [{transform_indices = @transform_0, window_bounds = array<i64: 1, 16, 128>}, {transform_indices = @transform_1, window_bounds = array<i64: 1, 1, 128>}, {transform_indices = @transform_2, window_bounds = array<i64: 1, 16, 128>}]} {
    %c0 = arith.constant 0 : index
    %c0_0 = arith.constant 0 : index
    %c0_1 = arith.constant 0 : index
    %0 = vector.load %arg2[%c0, %c0_0, %c0_1] : memref<1x16x128xf32, #tpu.memory_space<vmem>>, vector<1x16x128xf32>
    %1 = vector.shape_cast %0 : vector<1x16x128xf32> to vector<16x128xf32>
    %c0_2 = arith.constant 0 : index
    %c0_3 = arith.constant 0 : index
    %c0_4 = arith.constant 0 : index
    %2 = vector.load %arg3[%c0_2, %c0_3, %c0_4] : memref<1x1x128xf32, #tpu.memory_space<vmem>>, vector<1x1x128xf32>
    %3 = vector.shape_cast %2 : vector<1x1x128xf32> to vector<1x128xf32>
    %cst = arith.constant 9.99999996E-13 : f32
    %4 = vector.broadcast %cst : f32 to vector<1x128xf32>
    %5 = arith.maximumf %3, %4 : vector<1x128xf32>
    %6 = vector.broadcast %5 : vector<1x128xf32> to vector<16x128xf32>
    %7 = arith.divf %1, %6 : vector<16x128xf32>
    %cst_5 = arith.constant dense<0.000000e+00> : vector<16xf32>
    %8 = vector.multi_reduction <add>, %7, %cst_5 [1] : vector<16x128xf32> to vector<16xf32>
    %9 = vector.shape_cast %8 : vector<16xf32> to vector<16x1xf32>
    %cst_6 = arith.constant 9.99999996E-13 : f32
    %10 = vector.broadcast %cst_6 : f32 to vector<16x1xf32>
    %11 = arith.maximumf %9, %10 : vector<16x1xf32>
    %12 = vector.broadcast %11 : vector<16x1xf32> to vector<16x128xf32>
    %13 = arith.divf %7, %12 : vector<16x128xf32>
    %c0_7 = arith.constant 0 : index
    %c0_8 = arith.constant 0 : index
    %c0_9 = arith.constant 0 : index
    %14 = vector.load %arg4[%c0_7, %c0_8, %c0_9] : memref<1x16x128xf32, #tpu.memory_space<vmem>>, vector<1x16x128xf32>
    %15 = vector.shape_cast %14 : vector<1x16x128xf32> to vector<16x128xf32>
    %16 = vector.shape_cast %13 : vector<16x128xf32> to vector<1x16x128xf32>
    tpu.vector_store %arg4[%c0_7, %c0_8, %c0_9], %16 {strides = array<i32>} : memref<1x16x128xf32, #tpu.memory_space<vmem>>, vector<1x16x128xf32>,
    return
  }
  func.func @transform_0(%arg0: i32, %arg1: i32) -> (i32, i32, i32) {
    %c0_i32 = arith.constant 0 : i32
    %c0_i32_0 = arith.constant 0 : i32
    return %arg0, %arg1, %c0_i32 : i32, i32, i32
  }
  func.func @transform_1(%arg0: i32, %arg1: i32) -> (i32, i32, i32) {
    %c0_i32 = arith.constant 0 : i32
    %c0_i32_0 = arith.constant 0 : i32
    %c0_i32_1 = arith.constant 0 : i32
    return %arg0, %c0_i32, %c0_i32_0 : i32, i32, i32
  }
  func.func @transform_2(%arg0: i32, %arg1: i32) -> (i32, i32, i32) {
    %c0_i32 = arith.constant 0 : i32
    %c0_i32_0 = arith.constant 0 : i32
    return %arg0, %arg1, %c0_i32 : i32, i32, i32
  }
}

module attributes {stable_mosaic.version = 11 : i64} {
  func.func @_attn_pass1_kernel(%arg0: i32, %arg1: i32, %arg2: memref<16x128xbf16, #tpu.memory_space<vmem>>, %arg3: memref<128x128xbf16, #tpu.memory_space<vmem>>, %arg4: memref<1x16x128xf32, #tpu.memory_space<vmem>>, %arg5: memref<1x16x128xf32, #tpu.memory_space<vmem>>, %arg6: memref<1x1x128xf32, #tpu.memory_space<vmem>>) attributes {dimension_semantics = [#tpu.dimension_semantics<parallel>, #tpu.dimension_semantics<arbitrary>], iteration_bounds = array<i64: 2, 1>, scalar_prefetch = 0 : i64, scratch_operands = 0 : i64, tpu.core_type = #tpu.core_type<tc>, window_params = [{transform_indices = @transform_0, window_bounds = array<i64: 16, 128>}, {transform_indices = @transform_1, window_bounds = array<i64: 128, 128>}, {transform_indices = @transform_2, window_bounds = array<i64: 1, 16, 128>}, {transform_indices = @transform_3, window_bounds = array<i64: 1, 16, 128>}, {transform_indices = @transform_4, window_bounds = array<i64: 1, 1, 128>}]} {
    %c0 = arith.constant 0 : index
    %c0_0 = arith.constant 0 : index
    %c0_1 = arith.constant 0 : index
    %0 = vector.load %arg4[%c0, %c0_0, %c0_1] : memref<1x16x128xf32, #tpu.memory_space<vmem>>, vector<1x16x128xf32>
    %1 = vector.shape_cast %0 : vector<1x16x128xf32> to vector<16x128xf32>
    %c0_2 = arith.constant 0 : index
    %c0_3 = arith.constant 0 : index
    %2 = vector.load %arg2[%c0_2, %c0_3] : memref<16x128xbf16, #tpu.memory_space<vmem>>, vector<16x128xbf16>
    %c0_4 = arith.constant 0 : index
    %c0_5 = arith.constant 0 : index
    %3 = vector.load %arg3[%c0_4, %c0_5] : memref<128x128xbf16, #tpu.memory_space<vmem>>, vector<128x128xbf16>
    %cst = arith.constant dense<0.000000e+00> : vector<16x128xf32>
    %4 = tpu.matmul %2, %3, %cst {dimension_numbers = #tpu.dot_dimension_numbers<[1], [0], [0], [1], [0, 0, 1, 1], [], []>} : vector<16x128xbf16>, vector<128x128xbf16>, vector<16x128xf32> -> vector<16x128xf32>
    %cst_6 = arith.constant 9.99999971E-10 : f32
    %5 = vector.broadcast %cst_6 : f32 to vector<16x128xf32>
    %6 = arith.cmpf olt, %1, %5 : vector<16x128xf32>
    %cst_7 = arith.constant -1.000000e+09 : f32
    %7 = vector.broadcast %cst_7 : f32 to vector<16x128xf32>
    %8 = arith.select %6, %7, %4 : vector<16x128xi1>, vector<16x128xf32>
    %9 = tpu.iota {dimensions = array<i32: 1>} : vector<16x128xi32>
    %c16_i32 = arith.constant 16 : i32
    %10 = vector.broadcast %c16_i32 : i32 to vector<16x128xi32>
    %11 = arith.cmpi slt, %9, %10 : vector<16x128xi32>
    %cst_8 = arith.constant 0xFF800000 : f32
    %12 = vector.broadcast %cst_8 : f32 to vector<16x128xf32>
    %13 = arith.select %11, %8, %12 : vector<16x128xi1>, vector<16x128xf32>
    %cst_9 = arith.constant dense<0xFF800000> : vector<16xf32>
    %14 = vector.multi_reduction <maximumf>, %13, %cst_9 [1] : vector<16x128xf32> to vector<16xf32>
    %15 = vector.shape_cast %14 : vector<16xf32> to vector<16x1xf32>
    %16 = vector.broadcast %15 : vector<16x1xf32> to vector<16x128xf32>
    %17 = arith.subf %13, %16 : vector<16x128xf32>
    %18 = math.exp %17 : vector<16x128xf32>
    %cst_10 = arith.constant dense<0.000000e+00> : vector<16xf32>
    %19 = vector.multi_reduction <add>, %18, %cst_10 [1] : vector<16x128xf32> to vector<16xf32>
    %20 = vector.shape_cast %19 : vector<16xf32> to vector<16x1xf32>
    %21 = tpu.reciprocal %20 {approx = true} : vector<16x1xf32> -> vector<16x1xf32>
    %22 = vector.broadcast %21 : vector<16x1xf32> to vector<16x128xf32>
    %23 = arith.mulf %18, %22 : vector<16x128xf32>
    %cst_11 = arith.constant 9.99999971E-10 : f32
    %24 = vector.broadcast %cst_11 : f32 to vector<16x128xf32>
    %25 = arith.addf %1, %24 : vector<16x128xf32>
    %cst_12 = arith.constant 9.99999971E-10 : f32
    %26 = vector.broadcast %cst_12 : f32 to vector<16x128xf32>
    %27 = arith.addf %23, %26 : vector<16x128xf32>
    %28 = arith.mulf %25, %27 : vector<16x128xf32>
    %29 = math.sqrt %28 : vector<16x128xf32>
    %cst_13 = arith.constant 9.99999971E-10 : f32
    %30 = vector.broadcast %cst_13 : f32 to vector<16x128xf32>
    %31 = arith.subf %29, %30 : vector<16x128xf32>
    %c16_i32_14 = arith.constant 16 : i32
    %32 = arith.muli %arg1, %c16_i32_14 : i32
    %33 = tpu.iota {dimensions = array<i32: 0>} : vector<16x128xi32>
    %34 = vector.broadcast %32 : i32 to vector<16x128xi32>
    %35 = arith.addi %34, %33 : vector<16x128xi32>
    %c8_i32 = arith.constant 8 : i32
    %36 = vector.broadcast %c8_i32 : i32 to vector<16x128xi32>
    %37 = arith.cmpi slt, %35, %36 : vector<16x128xi32>
    %38 = arith.andi %11, %37 : vector<16x128xi1>
    %cst_15 = arith.constant 0.000000e+00 : f32
    %39 = vector.broadcast %cst_15 : f32 to vector<16x128xf32>
    %40 = arith.select %38, %31, %39 : vector<16x128xi1>, vector<16x128xf32>
    %c0_16 = arith.constant 0 : index
    %c0_17 = arith.constant 0 : index
    %c0_18 = arith.constant 0 : index
    %41 = vector.load %arg5[%c0_16, %c0_17, %c0_18] : memref<1x16x128xf32, #tpu.memory_space<vmem>>, vector<1x16x128xf32>
    %42 = vector.shape_cast %41 : vector<1x16x128xf32> to vector<16x128xf32>
    %43 = vector.shape_cast %40 : vector<16x128xf32> to vector<1x16x128xf32>
    tpu.vector_store %arg5[%c0_16, %c0_17, %c0_18], %43 {strides = array<i32>} : memref<1x16x128xf32, #tpu.memory_space<vmem>>, vector<1x16x128xf32>,
    %c0_i32 = arith.constant 0 : i32
    %44 = arith.cmpi eq, %arg1, %c0_i32 : i32
    %45 = arith.extui %44 : i1 to i32
    %c0_i32_19 = arith.constant 0 : i32
    %46 = arith.cmpi ne, %45, %c0_i32_19 : i32
    scf.if %46 {
      %cst_27 = arith.constant 0.000000e+00 : f32
      %53 = vector.broadcast %cst_27 : f32 to vector<1x1x128xf32>
      %c0_28 = arith.constant 0 : index
      %c0_29 = arith.constant 0 : index
      %c0_30 = arith.constant 0 : index
      %54 = vector.load %arg6[%c0_28, %c0_29, %c0_30] : memref<1x1x128xf32, #tpu.memory_space<vmem>>, vector<1x1x128xf32>
      tpu.vector_store %arg6[%c0_28, %c0_29, %c0_30], %53 {strides = array<i32>} : memref<1x1x128xf32, #tpu.memory_space<vmem>>, vector<1x1x128xf32>,
    } else {
    }
    %c0_20 = arith.constant 0 : index
    %c0_21 = arith.constant 0 : index
    %c0_22 = arith.constant 0 : index
    %47 = vector.load %arg6[%c0_20, %c0_21, %c0_22] : memref<1x1x128xf32, #tpu.memory_space<vmem>>, vector<1x1x128xf32>
    %cst_23 = arith.constant dense<0.000000e+00> : vector<128xf32>
    %48 = vector.multi_reduction <add>, %40, %cst_23 [0] : vector<16x128xf32> to vector<128xf32>
    %49 = vector.shape_cast %48 : vector<128xf32> to vector<1x128xf32>
    %50 = vector.shape_cast %49 : vector<1x128xf32> to vector<1x1x128xf32>
    %51 = arith.addf %47, %50 : vector<1x1x128xf32>
    %c0_24 = arith.constant 0 : index
    %c0_25 = arith.constant 0 : index
    %c0_26 = arith.constant 0 : index
    %52 = vector.load %arg6[%c0_24, %c0_25, %c0_26] : memref<1x1x128xf32, #tpu.memory_space<vmem>>, vector<1x1x128xf32>
    tpu.vector_store %arg6[%c0_24, %c0_25, %c0_26], %51 {strides = array<i32>} : memref<1x1x128xf32, #tpu.memory_space<vmem>>, vector<1x1x128xf32>,
    return
  }
  func.func @transform_0(%arg0: i32, %arg1: i32) -> (i32, i32) {
    %c1_i32 = arith.constant 1 : i32
    %0 = arith.muli %arg0, %c1_i32 : i32
    %1 = arith.addi %0, %arg1 : i32
    %c0_i32 = arith.constant 0 : i32
    %c0_i32_0 = arith.constant 0 : i32
    return %1, %c0_i32 : i32, i32
  }
  func.func @transform_1(%arg0: i32, %arg1: i32) -> (i32, i32) {
    %c0_i32 = arith.constant 0 : i32
    %c0_i32_0 = arith.constant 0 : i32
    return %c0_i32, %arg0 : i32, i32
  }
  func.func @transform_2(%arg0: i32, %arg1: i32) -> (i32, i32, i32) {
    %c0_i32 = arith.constant 0 : i32
    %c0_i32_0 = arith.constant 0 : i32
    return %arg0, %arg1, %c0_i32 : i32, i32, i32
  }
  func.func @transform_3(%arg0: i32, %arg1: i32) -> (i32, i32, i32) {
    %c0_i32 = arith.constant 0 : i32
    %c0_i32_0 = arith.constant 0 : i32
    return %arg0, %arg1, %c0_i32 : i32, i32, i32
  }
  func.func @transform_4(%arg0: i32, %arg1: i32) -> (i32, i32, i32) {
    %c0_i32 = arith.constant 0 : i32
    %c0_i32_0 = arith.constant 0 : i32
    %c0_i32_1 = arith.constant 0 : i32
    return %arg0, %c0_i32, %c0_i32_0 : i32, i32, i32
  }
}

</mosaic_0001>

<llo_original>
// kernel: masked_attention_forward.5
$region0: #{masked_attention_forward.5}
  #allocation0 [shape = 'u32[]', space=smem, size = 0x4, offset = 0x4, fixed_abs, tag = 'smem constant byte address 0x4 - core index']
  #allocation1 [shape = 'u32[144,128]{1,0:T(1,128)}', space=vmem, size = 0x12000, scoped, tag = 'internal scratch']
  %s0 = inlined_call_operand.vmem [shape: f32[2,16,128], index: 0, kind: input, shape index: {}]
  %s1 = inlined_call_operand.vmem [shape: f32[2,1,128], index: 1, kind: input, shape index: {}]
  %s2 = inlined_call_operand.vmem [shape: f32[2,16,128], index: 2, kind: output, shape index: {}]
  %s3 = sld [smem:[#allocation0]]
  $region41: #{masked_attention_forward.5} parent=0
    _
  %s5 = ssub.s32 1, %s3
  %s6 = scalar_select 0, %s5, %s3
  loop: start=0, step=1, limit=4
  $region2: #{masked_attention_forward.5} parent=0 // loop_pre_header
    _
  $region3: #{masked_attention_forward.5} parent=0 // loop_header
    %s8 = sphi 0, %s12
    %p9 = scmp.ge.s32.totalorder %s8, 4
    %s15 = sphi 0, %s27
    %s16 = sphi 0, %s23
    %s17 = sphi 0, %s15
    %s18 = sphi 0, %s16
    %s19 = sphi 0, %s17
    %s20 = sphi 0, %s18
    %s32 = sphi 0, %s34
    %s35 = sphi 0, %s32
    %s36 = sphi 0, %s35
    %s52 = sphi 0, %s36
    %s58 = sphi 0, %s60
    %s61 = sphi 0, %s58
    %s62 = sphi 0, %s61
    %s78 = sphi 0, %s62
    %s86 = sphi 0, %s88
    %s89 = sphi 0, %s86
    %s90 = sphi 0, %s89
    %s106 = sphi 0, %s90
  $region4: #{masked_attention_forward.5} parent=0 // loop_header_branch
    %11 = sbr.rel (%p9) target = $region8
  $region5: #{masked_attention_forward.5} parent=0 // loop_body
    %s13 = ssub.s32 %s8, 1
    %s14 = ssub.s32 %s8, 2
    %s21 = sadd.s32 1, %s16
    %p22 = scmp.ge.s32.totalorder %s21, 1
    %s23 = scalar_select %p22, 0, %s21
    %s24 = sadd.s32 1, %s15
    %s25 = scalar_select %p22, %s24, %s15
    %p26 = scmp.ge.s32.totalorder %s25, 2
    %s27 = scalar_select %p26, 0, %s25
    %s28 = ssub.s32 %s15, %s27
    %s29 = ssub.s32 %s16, %s23
    %s30 = sor.u32 %s28, %s29
    %p31 = scmp.eq.s32.totalorder %s30, 0
    %s33 = sadd.s32 %s32, 1
    %s34 = scalar_select %p31, %s32, %s33
    %p37 = pneg %p31
    %p38 = scmp.eq.s32.totalorder %s8, 1
    %p39 = por %p37, %p38
    %p40 = scmp.ne.s32.totalorder %s32, %s35
    %p41 = scmp.eq.s32.totalorder %s8, 0
    %p42 = por %p40, %p41
    %p43 = scmp.ne.s32.totalorder %s32, %s35
    %p44 = scmp.eq.s32.totalorder %s13, 1
    %p45 = por %p43, %p44
    %p46 = scmp.ne.s32.totalorder %s35, %s36
    %p47 = scmp.eq.s32.totalorder %s13, 0
    %p48 = por %p46, %p47
    %p49 = scmp.ne.s32.totalorder %s35, %s36
    %p50 = scmp.eq.s32.totalorder %s14, 1
    %p51 = por %p49, %p50
    %p53 = scmp.ne.s32.totalorder %s36, %s52
    %p54 = scmp.eq.s32.totalorder %s14, 0
    %p55 = por %p53, %p54
    %s56 = ssub.s32 %s15, %s27
    %p57 = scmp.eq.s32.totalorder %s56, 0
    %s59 = sadd.s32 %s58, 1
    %s60 = scalar_select %p57, %s58, %s59
    %p63 = pneg %p57
    %p64 = scmp.eq.s32.totalorder %s8, 1
    %p65 = por %p63, %p64
    %p66 = scmp.ne.s32.totalorder %s58, %s61
    %p67 = scmp.eq.s32.totalorder %s8, 0
    %p68 = por %p66, %p67
    %p69 = scmp.ne.s32.totalorder %s58, %s61
    %p70 = scmp.eq.s32.totalorder %s13, 1
    %p71 = por %p69, %p70
    %p72 = scmp.ne.s32.totalorder %s61, %s62
    %p73 = scmp.eq.s32.totalorder %s13, 0
    %p74 = por %p72, %p73
    %p75 = scmp.ne.s32.totalorder %s61, %s62
    %p76 = scmp.eq.s32.totalorder %s14, 1
    %p77 = por %p75, %p76
    %p79 = scmp.ne.s32.totalorder %s62, %s78
    %p80 = scmp.eq.s32.totalorder %s14, 0
    %p81 = por %p79, %p80
    %s82 = ssub.s32 %s15, %s27
    %s83 = ssub.s32 %s16, %s23
    %s84 = sor.u32 %s82, %s83
    %p85 = scmp.eq.s32.totalorder %s84, 0
    %s87 = sadd.s32 %s86, 1
    %s88 = scalar_select %p85, %s86, %s87
    %p91 = pneg %p85
    %p92 = scmp.eq.s32.totalorder %s8, 1
    %p93 = por %p91, %p92
    %p94 = scmp.ne.s32.totalorder %s86, %s89
    %p95 = scmp.eq.s32.totalorder %s8, 0
    %p96 = por %p94, %p95
    %p97 = scmp.ne.s32.totalorder %s86, %s89
    %p98 = scmp.eq.s32.totalorder %s13, 1
    %p99 = por %p97, %p98
    %p100 = scmp.ne.s32.totalorder %s89, %s90
    %p101 = scmp.eq.s32.totalorder %s13, 0
    %p102 = por %p100, %p101
    %p103 = scmp.ne.s32.totalorder %s89, %s90
    %p104 = scmp.eq.s32.totalorder %s14, 1
    %p105 = por %p103, %p104
    %p107 = scmp.ne.s32.totalorder %s90, %s106
    %p108 = scmp.eq.s32.totalorder %s14, 0
    %p109 = por %p107, %p108
    %p110 = scmp.le.s32.totalorder 1, %s8
    %p111 = scmp.lt.s32.totalorder %s8, 3
    %p112 = pnand %p110, %p111
    %p113 = pneg %p112
    // Predicated region
    $region9: #{masked_attention_forward.5} parent=5 // pred_check
      _
    $region10: #{masked_attention_forward.5} parent=5 // pred_check_branch
      %115 = sbr.rel (%p112) target = $region12
    $region11: #{masked_attention_forward.5} parent=5 // pred_region
      %s116 = ssub.s32 %s8, 1
    $region12: #{masked_attention_forward.5} parent=5 // pred_fallthru
      _
    %p117 = scmp.lt.s32.totalorder %s8, 2
    // Predicated region
    $region13: #{masked_attention_forward.5} parent=5 // pred_check
      %p118 = pneg %p117
    $region14: #{masked_attention_forward.5} parent=5 // pred_check_branch
      %120 = sbr.rel (%p118) target = $region16
    $region15: #{masked_attention_forward.5} parent=5 // pred_region
      // Predicated region
      $region17: #{masked_attention_forward.5} parent=15 // pred_check
        %p121 = pneg %p42
      $region18: #{masked_attention_forward.5} parent=15 // pred_check_branch
        %123 = sbr.rel (%p121) target = $region20
      $region19: #{masked_attention_forward.5} parent=15 // pred_region
        %s124 = smul.u32 2, %s16
        %p125 = scmp.lt.s32.totalorder %s15, 1
        %s126 = scalar_select %p125, %s15, 1
        %p127 = scmp.lt.s32.totalorder %s124, 1
        %s128 = scalar_select %p127, %s124, 1
        %s129 = smul.addr %s126, 2
        %s130 = sadd.s32 %s128, %s129
        %s131 = smul.addr %s130, 8
        %s132 = scalar_lea.vmem %s0, %s131
        %s133 = smul.u32 2, %s16
      $region20: #{masked_attention_forward.5} parent=15 // pred_fallthru
        _
      // Predicated region
      $region21: #{masked_attention_forward.5} parent=15 // pred_check
        %p134 = pneg %p68
      $region22: #{masked_attention_forward.5} parent=15 // pred_check_branch
        %136 = sbr.rel (%p134) target = $region24
      $region23: #{masked_attention_forward.5} parent=15 // pred_region
        %p137 = scmp.lt.s32.totalorder %s15, 1
        %s138 = scalar_select %p137, %s15, 1
        %s139 = scalar_lea.vmem %s1, %s138
      $region24: #{masked_attention_forward.5} parent=15 // pred_fallthru
        _
    $region16: #{masked_attention_forward.5} parent=5 // pred_fallthru
      _
    %p140 = scmp.le.s32.totalorder 1, %s8
    %p141 = scmp.lt.s32.totalorder %s8, 3
    %p142 = pnand %p140, %p141
    %p143 = pneg %p142
    // Predicated region
    $region25: #{masked_attention_forward.5} parent=5 // pred_check
      _
    $region26: #{masked_attention_forward.5} parent=5 // pred_check_branch
      %145 = sbr.rel (%p142) target = $region28
    $region27: #{masked_attention_forward.5} parent=5 // pred_region
      %s146 = ssub.s32 %s8, 1
      %s147 = smul.u32 2, %s18
      %p148 = scmp.lt.s32.totalorder %s17, 1
      %s149 = scalar_select %p148, %s17, 1
      %p150 = scmp.lt.s32.totalorder %s147, 1
      %s151 = scalar_select %p150, %s147, 1
      %s152 = smul.addr %s149, 2
      %s153 = sadd.s32 %s151, %s152
      %s154 = smul.addr %s153, 8
      %s155 = scalar_lea.vmem %s0, %s154
      %p156 = pneg %p48
      %p157 = pneg %p45
      %p158 = scmp.lt.s32.totalorder %s17, 1
      %s159 = scalar_select %p158, %s17, 1
      %s160 = scalar_lea.vmem %s1, %s159
      %p161 = pneg %p74
      %p162 = pneg %p71
      %p163 = pneg %p102
      %p164 = pneg %p99
      %s165 = smul.u32 2, %s18
      %p166 = scmp.lt.s32.totalorder %s17, 1
      %s167 = scalar_select %p166, %s17, 1
      %p168 = scmp.lt.s32.totalorder %s165, 1
      %s169 = scalar_select %p168, %s165, 1
      %s170 = smul.addr %s167, 2
      %s171 = sadd.s32 %s169, %s170
      %s172 = smul.addr %s171, 8
      %s173 = scalar_lea.vmem %s2, %s172
      %s174 = smul.u32 2, %s18
      %p175 = scmp.lt.s32.totalorder %s17, 1
      %s176 = scalar_select %p175, %s17, 1
      %p177 = scmp.lt.s32.totalorder %s174, 1
      %s178 = scalar_select %p177, %s174, 1
      %s179 = smul.addr %s176, 2
      %s180 = sadd.s32 %s178, %s179
      %s181 = smul.addr %s180, 8
      %s182 = scalar_lea.vmem %s0, %s181
      %s183 = smul.u32 2, %s18
      %p184 = scmp.lt.s32.totalorder %s17, 1
      %s185 = scalar_select %p184, %s17, 1
      %s186 = scalar_lea.vmem %s1, %s185
      %s187 = smul.u32 2, %s18
      %p188 = scmp.lt.s32.totalorder %s17, 1
      %s189 = scalar_select %p188, %s17, 1
      %p190 = scmp.lt.s32.totalorder %s187, 1
      %s191 = scalar_select %p190, %s187, 1
      %s192 = smul.addr %s189, 2
      %s193 = sadd.s32 %s191, %s192
      %s194 = smul.addr %s193, 8
      %s195 = scalar_lea.vmem %s2, %s194
      %s196 = smul.u32 2, %s18
      %v197 = vld [vmem:[%s182] sm:$0xff]
      %v198 = vld [vmem:[%s182 + $0x8] sm:$0xff]
      %v199 = vld [vmem:[%s186] sm:$0x1]
      %v200 = vmax.f32 %v199, 1e-12
      %v202 = vlaneseq
      %v203 = vshrl.u32 %v202, 7
      %v204 = vsub.s32 0, %v203
      %v205 = vrot.slane %v200, %v204
      %v207 = vrcp.pop %v205
      %v208 = vmul.f32 %v197, %v207
      %v209 = vmul.f32 %v198, %v207
      %210 = vadd.xlane.f32.xlu0 %v208
      %v211 = vpop.xlane.xlu0 %210
      %212 = vadd.xlane.f32.xlu0 %v209
      %v213 = vpop.xlane.xlu0 %212
      %v214 = vmax.f32 %v211, 1e-12
      %v215 = vmax.f32 %v213, 1e-12
      %v216 = vrcp.pop %v214
      %v217 = vmul.f32 %v208, %v216
      %v218 = vrcp.pop %v215
      %v219 = vmul.f32 %v209, %v218
      %220 = vst [vmem:[%s195] sm:$0xff] %v217
      %221 = vst [vmem:[%s195 + $0x8] sm:$0xff] %v219
      %s222 = smul.u32 2, %s18
      %p223 = scmp.lt.s32.totalorder %s17, 1
      %s224 = scalar_select %p223, %s17, 1
      %p225 = scmp.lt.s32.totalorder %s222, 1
      %s226 = scalar_select %p225, %s222, 1
      %s227 = smul.addr %s224, 2
      %s228 = sadd.s32 %s226, %s227
      %s229 = smul.addr %s228, 8
      %s230 = scalar_lea.vmem %s2, %s229
      // Predicated region
      $region29: #{masked_attention_forward.5} parent=27 // pred_check
        %p231 = pneg %p99
      $region30: #{masked_attention_forward.5} parent=27 // pred_check_branch
        %233 = sbr.rel (%p231) target = $region32
      $region31: #{masked_attention_forward.5} parent=27 // pred_region
        %s234 = smul.u32 2, %s18
      $region32: #{masked_attention_forward.5} parent=27 // pred_fallthru
        _
    $region28: #{masked_attention_forward.5} parent=5 // pred_fallthru
      _
    %p235 = scmp.le.s32.totalorder 2, %s8
    // Predicated region
    $region33: #{masked_attention_forward.5} parent=5 // pred_check
      %p236 = pneg %p235
    $region34: #{masked_attention_forward.5} parent=5 // pred_check_branch
      %238 = sbr.rel (%p236) target = $region36
    $region35: #{masked_attention_forward.5} parent=5 // pred_region
      %s239 = ssub.s32 %s8, 2
      // Predicated region
      $region37: #{masked_attention_forward.5} parent=35 // pred_check
        %p240 = pneg %p105
      $region38: #{masked_attention_forward.5} parent=35 // pred_check_branch
        %242 = sbr.rel (%p240) target = $region40
      $region39: #{masked_attention_forward.5} parent=35 // pred_region
        %s243 = smul.u32 2, %s20
        %p244 = scmp.lt.s32.totalorder %s19, 1
        %s245 = scalar_select %p244, %s19, 1
        %p246 = scmp.lt.s32.totalorder %s243, 1
        %s247 = scalar_select %p246, %s243, 1
        %s248 = smul.addr %s245, 2
        %s249 = sadd.s32 %s247, %s248
        %s250 = smul.addr %s249, 8
        %s251 = scalar_lea.vmem %s2, %s250
      $region40: #{masked_attention_forward.5} parent=35 // pred_fallthru
        _
    $region36: #{masked_attention_forward.5} parent=5 // pred_fallthru
      _
  $region6: #{masked_attention_forward.5} parent=0 // loop_footer
    %s12 = sadd.s32 1, %s8
  $region7: #{masked_attention_forward.5} parent=0 // loop_footer_branch
    %7 = sbr.rel target = $region3
  $region8: #{masked_attention_forward.5} parent=0 // loop_exit
    _

// kernel: masked_attention_forward.4
$region0: #{masked_attention_forward.4}
  #allocation0 [shape = 'u32[]', space=smem, size = 0x4, offset = 0x4, fixed_abs, tag = 'smem constant byte address 0x4 - core index']
  #allocation1 [shape = 'u32[144,128]{1,0:T(1,128)}', space=vmem, size = 0x12000, scoped, tag = 'internal scratch']
  %s0 = inlined_call_operand.vmem [shape: bf16[32,128], index: 0, kind: input, shape index: {}]
  %s1 = inlined_call_operand.vmem [shape: bf16[128,256], index: 1, kind: input, shape index: {}]
  %s2 = inlined_call_operand.vmem [shape: f32[2,16,128], index: 2, kind: input, shape index: {}]
  %s3 = inlined_call_operand.vmem [shape: f32[2,16,128], index: 3, kind: output, shape index: {0}]
  %s4 = inlined_call_operand.vmem [shape: f32[2,1,128], index: 4, kind: output, shape index: {1}]
  %5 = xla_tuple %s3, %s4
  %s6 = sld [smem:[#allocation0]]
  $region98: #{masked_attention_forward.4} parent=0
    _
  %s8 = ssub.s32 1, %s6
  %s9 = scalar_select 0, %s8, %s6
  $region1: #{masked_attention_forward.4} parent=0
    #allocation2 [shape = 'u8[65536]{0}', space=vmem, size = 0x10000, scoped, tag = 'input window, operand 1']
    loop: start=0, step=1, limit=4
    $region2: #{masked_attention_forward.4} parent=1 // loop_pre_header
      _
    $region3: #{masked_attention_forward.4} parent=1 // loop_header
      %s11 = sphi 0, %s15
      %p12 = scmp.ge.s32.totalorder %s11, 4
      %s18 = sphi 0, %s30
      %s19 = sphi 0, %s26
      %s20 = sphi 0, %s18
      %s21 = sphi 0, %s19
      %s22 = sphi 0, %s20
      %s23 = sphi 0, %s21
      %s35 = sphi 0, %s37
      %s38 = sphi 0, %s35
      %s39 = sphi 0, %s38
      %s55 = sphi 0, %s39
      %s61 = sphi 0, %s63
      %s64 = sphi 0, %s61
      %s65 = sphi 0, %s64
      %s81 = sphi 0, %s65
      %s89 = sphi 0, %s91
      %s92 = sphi 0, %s89
      %s93 = sphi 0, %s92
      %s109 = sphi 0, %s93
      %s117 = sphi 0, %s119
      %s120 = sphi 0, %s117
      %s121 = sphi 0, %s120
      %s137 = sphi 0, %s121
      %s143 = sphi 0, %s145
      %s146 = sphi 0, %s143
      %s147 = sphi 0, %s146
      %s163 = sphi 0, %s147
    $region4: #{masked_attention_forward.4} parent=1 // loop_header_branch
      %14 = sbr.rel (%p12) target = $region8
    $region5: #{masked_attention_forward.4} parent=1 // loop_body
      %s16 = ssub.s32 %s11, 1
      %s17 = ssub.s32 %s11, 2
      %s24 = sadd.s32 1, %s19
      %p25 = scmp.ge.s32.totalorder %s24, 1
      %s26 = scalar_select %p25, 0, %s24
      %s27 = sadd.s32 1, %s18
      %s28 = scalar_select %p25, %s27, %s18
      %p29 = scmp.ge.s32.totalorder %s28, 2
      %s30 = scalar_select %p29, 0, %s28
      %s31 = sadd.s32 %s18, %s19
      %s32 = sadd.s32 %s30, %s26
      %s33 = ssub.s32 %s31, %s32
      %p34 = scmp.eq.s32.totalorder %s33, 0
      %s36 = sadd.s32 %s35, 1
      %s37 = scalar_select %p34, %s35, %s36
      %p40 = pneg %p34
      %p41 = scmp.eq.s32.totalorder %s11, 1
      %p42 = por %p40, %p41
      %p43 = scmp.ne.s32.totalorder %s35, %s38
      %p44 = scmp.eq.s32.totalorder %s11, 0
      %p45 = por %p43, %p44
      %p46 = scmp.ne.s32.totalorder %s35, %s38
      %p47 = scmp.eq.s32.totalorder %s16, 1
      %p48 = por %p46, %p47
      %p49 = scmp.ne.s32.totalorder %s38, %s39
      %p50 = scmp.eq.s32.totalorder %s16, 0
      %p51 = por %p49, %p50
      %p52 = scmp.ne.s32.totalorder %s38, %s39
      %p53 = scmp.eq.s32.totalorder %s17, 1
      %p54 = por %p52, %p53
      %p56 = scmp.ne.s32.totalorder %s39, %s55
      %p57 = scmp.eq.s32.totalorder %s17, 0
      %p58 = por %p56, %p57
      %s59 = ssub.s32 %s18, %s30
      %p60 = scmp.eq.s32.totalorder %s59, 0
      %s62 = sadd.s32 %s61, 1
      %s63 = scalar_select %p60, %s61, %s62
      %p66 = pneg %p60
      %p67 = scmp.eq.s32.totalorder %s11, 1
      %p68 = por %p66, %p67
      %p69 = scmp.ne.s32.totalorder %s61, %s64
      %p70 = scmp.eq.s32.totalorder %s11, 0
      %p71 = por %p69, %p70
      %p72 = scmp.ne.s32.totalorder %s61, %s64
      %p73 = scmp.eq.s32.totalorder %s16, 1
      %p74 = por %p72, %p73
      %p75 = scmp.ne.s32.totalorder %s64, %s65
      %p76 = scmp.eq.s32.totalorder %s16, 0
      %p77 = por %p75, %p76
      %p78 = scmp.ne.s32.totalorder %s64, %s65
      %p79 = scmp.eq.s32.totalorder %s17, 1
      %p80 = por %p78, %p79
      %p82 = scmp.ne.s32.totalorder %s65, %s81
      %p83 = scmp.eq.s32.totalorder %s17, 0
      %p84 = por %p82, %p83
      %s85 = ssub.s32 %s18, %s30
      %s86 = ssub.s32 %s19, %s26
      %s87 = sor.u32 %s85, %s86
      %p88 = scmp.eq.s32.totalorder %s87, 0
      %s90 = sadd.s32 %s89, 1
      %s91 = scalar_select %p88, %s89, %s90
      %p94 = pneg %p88
      %p95 = scmp.eq.s32.totalorder %s11, 1
      %p96 = por %p94, %p95
      %p97 = scmp.ne.s32.totalorder %s89, %s92
      %p98 = scmp.eq.s32.totalorder %s11, 0
      %p99 = por %p97, %p98
      %p100 = scmp.ne.s32.totalorder %s89, %s92
      %p101 = scmp.eq.s32.totalorder %s16, 1
      %p102 = por %p100, %p101
      %p103 = scmp.ne.s32.totalorder %s92, %s93
      %p104 = scmp.eq.s32.totalorder %s16, 0
      %p105 = por %p103, %p104
      %p106 = scmp.ne.s32.totalorder %s92, %s93
      %p107 = scmp.eq.s32.totalorder %s17, 1
      %p108 = por %p106, %p107
      %p110 = scmp.ne.s32.totalorder %s93, %s109
      %p111 = scmp.eq.s32.totalorder %s17, 0
      %p112 = por %p110, %p111
      %s113 = ssub.s32 %s18, %s30
      %s114 = ssub.s32 %s19, %s26
      %s115 = sor.u32 %s113, %s114
      %p116 = scmp.eq.s32.totalorder %s115, 0
      %s118 = sadd.s32 %s117, 1
      %s119 = scalar_select %p116, %s117, %s118
      %p122 = pneg %p116
      %p123 = scmp.eq.s32.totalorder %s11, 1
      %p124 = por %p122, %p123
      %p125 = scmp.ne.s32.totalorder %s117, %s120
      %p126 = scmp.eq.s32.totalorder %s11, 0
      %p127 = por %p125, %p126
      %p128 = scmp.ne.s32.totalorder %s117, %s120
      %p129 = scmp.eq.s32.totalorder %s16, 1
      %p130 = por %p128, %p129
      %p131 = scmp.ne.s32.totalorder %s120, %s121
      %p132 = scmp.eq.s32.totalorder %s16, 0
      %p133 = por %p131, %p132
      %p134 = scmp.ne.s32.totalorder %s120, %s121
      %p135 = scmp.eq.s32.totalorder %s17, 1
      %p136 = por %p134, %p135
      %p138 = scmp.ne.s32.totalorder %s121, %s137
      %p139 = scmp.eq.s32.totalorder %s17, 0
      %p140 = por %p138, %p139
      %s141 = ssub.s32 %s18, %s30
      %p142 = scmp.eq.s32.totalorder %s141, 0
      %s144 = sadd.s32 %s143, 1
      %s145 = scalar_select %p142, %s143, %s144
      %p148 = pneg %p142
      %p149 = scmp.eq.s32.totalorder %s11, 1
      %p150 = por %p148, %p149
      %p151 = scmp.ne.s32.totalorder %s143, %s146
      %p152 = scmp.eq.s32.totalorder %s11, 0
      %p153 = por %p151, %p152
      %p154 = scmp.ne.s32.totalorder %s143, %s146
      %p155 = scmp.eq.s32.totalorder %s16, 1
      %p156 = por %p154, %p155
      %p157 = scmp.ne.s32.totalorder %s146, %s147
      %p158 = scmp.eq.s32.totalorder %s16, 0
      %p159 = por %p157, %p158
      %p160 = scmp.ne.s32.totalorder %s146, %s147
      %p161 = scmp.eq.s32.totalorder %s17, 1
      %p162 = por %p160, %p161
      %p164 = scmp.ne.s32.totalorder %s147, %s163
      %p165 = scmp.eq.s32.totalorder %s17, 0
      %p166 = por %p164, %p165
      %p167 = scmp.le.s32.totalorder 1, %s11
      %p168 = scmp.lt.s32.totalorder %s11, 3
      %p169 = pnand %p167, %p168
      %p170 = pneg %p169
      // Predicated region
      $region9: #{masked_attention_forward.4} parent=5 // pred_check
        _
      $region10: #{masked_attention_forward.4} parent=5 // pred_check_branch
        %172 = sbr.rel (%p169) target = $region12
      $region11: #{masked_attention_forward.4} parent=5 // pred_region
        %s173 = ssub.s32 %s11, 1
      $region12: #{masked_attention_forward.4} parent=5 // pred_fallthru
        _
      %p174 = scmp.lt.s32.totalorder %s11, 2
      // Predicated region
      $region13: #{masked_attention_forward.4} parent=5 // pred_check
        %p175 = pneg %p174
      $region14: #{masked_attention_forward.4} parent=5 // pred_check_branch
        %177 = sbr.rel (%p175) target = $region16
      $region15: #{masked_attention_forward.4} parent=5 // pred_region
        // Predicated region
        $region17: #{masked_attention_forward.4} parent=15 // pred_check
          %p178 = pneg %p45
        $region18: #{masked_attention_forward.4} parent=15 // pred_check_branch
          %180 = sbr.rel (%p178) target = $region20
        $region19: #{masked_attention_forward.4} parent=15 // pred_region
          %s181 = sadd.s32 %s18, %s19
          %s182 = smul.u32 2, %s181
          %p183 = scmp.lt.s32.totalorder %s182, 3
          %s184 = scalar_select %p183, %s182, 3
          %s185 = smul.addr %s184, 4
          %s186 = scalar_lea.vmem %s0, %s185
          %s187 = sadd.s32 %s18, %s19
          %s188 = smul.u32 2, %s187
        $region20: #{masked_attention_forward.4} parent=15 // pred_fallthru
          _
        // Predicated region
        $region21: #{masked_attention_forward.4} parent=15 // pred_check
          %p189 = pneg %p71
        $region22: #{masked_attention_forward.4} parent=15 // pred_check_branch
          %191 = sbr.rel (%p189) target = $region24
        $region23: #{masked_attention_forward.4} parent=15 // pred_region
          %s192 = sand.u32 %s61, 1
          %s193 = sand.u32 %s61, 1
          %s194 = smul.addr %s193, 64
          %s195 = scalar_lea.vmem [#allocation2], %s194
          %s196 = smul.addr %s18, 4
          %s197 = scalar_lea.vmem %s1, %s196
          // Predicated region
          $region25: #{masked_attention_forward.4} parent=23 // pred_check
            _
          $region26: #{masked_attention_forward.4} parent=23 // pred_check_branch
            %199 = sbr.rel (0) target = $region28
          $region27: #{masked_attention_forward.4} parent=23 // pred_region
            // Predicated region
            $region29: #{masked_attention_forward.4} parent=27 // pred_check
              _
            $region30: #{masked_attention_forward.4} parent=27 // pred_check_branch
              %201 = sbr.rel target = $region32
            $region31: #{masked_attention_forward.4} parent=27 // pred_region
              // Predicated region
              $region44: #{masked_attention_forward.4} parent=31 // pred_check
                _
              $region45: #{masked_attention_forward.4} parent=31 // pred_check_branch
                %246 = sbr.rel (0) target = $region47
              $region46: #{masked_attention_forward.4} parent=31 // pred_region
                loop: start=0, step=1, limit=1
                $region48: #{masked_attention_forward.4} parent=46 // loop_pre_header
                  _
                $region49: #{masked_attention_forward.4} parent=46 // loop_header
                  %s248 = sphi 0, %s252
                  %p249 = scmp.ge.s32.totalorder %s248, 1
                  %s253 = sphi %s197, %s197
                  %s254 = sphi %s195, %s195
                $region50: #{masked_attention_forward.4} parent=46 // loop_header_branch
                  %251 = sbr.rel (%p249) target = $region54
                $region51: #{masked_attention_forward.4} parent=46 // loop_body
                  _
                $region52: #{masked_attention_forward.4} parent=46 // loop_footer
                  %s252 = sadd.s32 1, %s248
                $region53: #{masked_attention_forward.4} parent=46 // loop_footer_branch
                  %247 = sbr.rel target = $region49
                $region54: #{masked_attention_forward.4} parent=46 // loop_exit
                  _
                loop: start=0, step=1, limit=1
                $region55: #{masked_attention_forward.4} parent=46 // loop_pre_header
                  _
                $region56: #{masked_attention_forward.4} parent=46 // loop_header
                  %s257 = sphi 0, %s261
                  %p258 = scmp.ge.s32.totalorder %s257, 1
                  %s262 = sphi %s197, %s197
                  %s263 = sphi %s195, %s195
                $region57: #{masked_attention_forward.4} parent=46 // loop_header_branch
                  %260 = sbr.rel (%p258) target = $region61
                $region58: #{masked_attention_forward.4} parent=46 // loop_body
                  %v264 = vld [vmem:[%s262] sm:$0xf]
                  %265 = vst [vmem:[%s263] sm:$0xf] %v264
                  %v266 = vld [vmem:[%s262 + $0x8] sm:$0xf]
                  %267 = vst [vmem:[%s263 + $0x4] sm:$0xf] %v266
                  %v268 = vld [vmem:[%s262 + $0x10] sm:$0xf]
                  %269 = vst [vmem:[%s263 + $0x8] sm:$0xf] %v268
                  %v270 = vld [vmem:[%s262 + $0x18] sm:$0xf]
                  %271 = vst [vmem:[%s263 + $0xc] sm:$0xf] %v270
                  %v272 = vld [vmem:[%s262 + $0x20] sm:$0xf]
                  %273 = vst [vmem:[%s263 + $0x10] sm:$0xf] %v272
                  %v274 = vld [vmem:[%s262 + $0x28] sm:$0xf]
                  %275 = vst [vmem:[%s263 + $0x14] sm:$0xf] %v274
                  %v276 = vld [vmem:[%s262 + $0x30] sm:$0xf]
                  %277 = vst [vmem:[%s263 + $0x18] sm:$0xf] %v276
                  %v278 = vld [vmem:[%s262 + $0x38] sm:$0xf]
                  %279 = vst [vmem:[%s263 + $0x1c] sm:$0xf] %v278
                  %v280 = vld [vmem:[%s262 + $0x40] sm:$0xf]
                  %281 = vst [vmem:[%s263 + $0x20] sm:$0xf] %v280
                  %v282 = vld [vmem:[%s262 + $0x48] sm:$0xf]
                  %283 = vst [vmem:[%s263 + $0x24] sm:$0xf] %v282
                  %v284 = vld [vmem:[%s262 + $0x50] sm:$0xf]
                  %285 = vst [vmem:[%s263 + $0x28] sm:$0xf] %v284
                  %v286 = vld [vmem:[%s262 + $0x58] sm:$0xf]
                  %287 = vst [vmem:[%s263 + $0x2c] sm:$0xf] %v286
                  %v288 = vld [vmem:[%s262 + $0x60] sm:$0xf]
                  %289 = vst [vmem:[%s263 + $0x30] sm:$0xf] %v288
                  %v290 = vld [vmem:[%s262 + $0x68] sm:$0xf]
                  %291 = vst [vmem:[%s263 + $0x34] sm:$0xf] %v290
                  %v292 = vld [vmem:[%s262 + $0x70] sm:$0xf]
                  %293 = vst [vmem:[%s263 + $0x38] sm:$0xf] %v292
                  %v294 = vld [vmem:[%s262 + $0x78] sm:$0xf]
                  %295 = vst [vmem:[%s263 + $0x3c] sm:$0xf] %v294
                $region59: #{masked_attention_forward.4} parent=46 // loop_footer
                  %s261 = sadd.s32 1, %s257
                $region60: #{masked_attention_forward.4} parent=46 // loop_footer_branch
                  %256 = sbr.rel target = $region56
                $region61: #{masked_attention_forward.4} parent=46 // loop_exit
                  _
              $region47: #{masked_attention_forward.4} parent=31 // pred_fallthru
                _
            $region32: #{masked_attention_forward.4} parent=27 // pred_fallthru
              _
            // Predicated region
            $region33: #{masked_attention_forward.4} parent=27 // pred_check
              _
            $region34: #{masked_attention_forward.4} parent=27 // pred_check_branch
              %203 = sbr.rel (0) target = $region36
            $region35: #{masked_attention_forward.4} parent=27 // pred_region
              loop: start=0, step=1, limit=1
              $region37: #{masked_attention_forward.4} parent=35 // loop_pre_header
                _
              $region38: #{masked_attention_forward.4} parent=35 // loop_header
                %s206 = sphi 0, %s210
                %p207 = scmp.ge.s32.totalorder %s206, 1
                %s211 = sphi %s197, %s197
                %s212 = sphi %s195, %s195
              $region39: #{masked_attention_forward.4} parent=35 // loop_header_branch
                %209 = sbr.rel (%p207) target = $region43
              $region40: #{masked_attention_forward.4} parent=35 // loop_body
                %v213 = vld [vmem:[%s211] sm:$0xf]
                %214 = vst [vmem:[%s212] sm:$0xf] %v213
                %v215 = vld [vmem:[%s211 + $0x8] sm:$0xf]
                %216 = vst [vmem:[%s212 + $0x4] sm:$0xf] %v215
                %v217 = vld [vmem:[%s211 + $0x10] sm:$0xf]
                %218 = vst [vmem:[%s212 + $0x8] sm:$0xf] %v217
                %v219 = vld [vmem:[%s211 + $0x18] sm:$0xf]
                %220 = vst [vmem:[%s212 + $0xc] sm:$0xf] %v219
                %v221 = vld [vmem:[%s211 + $0x20] sm:$0xf]
                %222 = vst [vmem:[%s212 + $0x10] sm:$0xf] %v221
                %v223 = vld [vmem:[%s211 + $0x28] sm:$0xf]
                %224 = vst [vmem:[%s212 + $0x14] sm:$0xf] %v223
                %v225 = vld [vmem:[%s211 + $0x30] sm:$0xf]
                %226 = vst [vmem:[%s212 + $0x18] sm:$0xf] %v225
                %v227 = vld [vmem:[%s211 + $0x38] sm:$0xf]
                %228 = vst [vmem:[%s212 + $0x1c] sm:$0xf] %v227
                %v229 = vld [vmem:[%s211 + $0x40] sm:$0xf]
                %230 = vst [vmem:[%s212 + $0x20] sm:$0xf] %v229
                %v231 = vld [vmem:[%s211 + $0x48] sm:$0xf]
                %232 = vst [vmem:[%s212 + $0x24] sm:$0xf] %v231
                %v233 = vld [vmem:[%s211 + $0x50] sm:$0xf]
                %234 = vst [vmem:[%s212 + $0x28] sm:$0xf] %v233
                %v235 = vld [vmem:[%s211 + $0x58] sm:$0xf]
                %236 = vst [vmem:[%s212 + $0x2c] sm:$0xf] %v235
                %v237 = vld [vmem:[%s211 + $0x60] sm:$0xf]
                %238 = vst [vmem:[%s212 + $0x30] sm:$0xf] %v237
                %v239 = vld [vmem:[%s211 + $0x68] sm:$0xf]
                %240 = vst [vmem:[%s212 + $0x34] sm:$0xf] %v239
                %v241 = vld [vmem:[%s211 + $0x70] sm:$0xf]
                %242 = vst [vmem:[%s212 + $0x38] sm:$0xf] %v241
                %v243 = vld [vmem:[%s211 + $0x78] sm:$0xf]
                %244 = vst [vmem:[%s212 + $0x3c] sm:$0xf] %v243
              $region41: #{masked_attention_forward.4} parent=35 // loop_footer
                %s210 = sadd.s32 1, %s206
              $region42: #{masked_attention_forward.4} parent=35 // loop_footer_branch
                %205 = sbr.rel target = $region38
              $region43: #{masked_attention_forward.4} parent=35 // loop_exit
                _
            $region36: #{masked_attention_forward.4} parent=27 // pred_fallthru
              _
          $region28: #{masked_attention_forward.4} parent=23 // pred_fallthru
            _
          %296 = vnop
        $region24: #{masked_attention_forward.4} parent=15 // pred_fallthru
          _
        // Predicated region
        $region62: #{masked_attention_forward.4} parent=15 // pred_check
          %p297 = pneg %p99
        $region63: #{masked_attention_forward.4} parent=15 // pred_check_branch
          %299 = sbr.rel (%p297) target = $region65
        $region64: #{masked_attention_forward.4} parent=15 // pred_region
          %s300 = smul.u32 2, %s19
          %p301 = scmp.lt.s32.totalorder %s18, 1
          %s302 = scalar_select %p301, %s18, 1
          %p303 = scmp.lt.s32.totalorder %s300, 1
          %s304 = scalar_select %p303, %s300, 1
          %s305 = smul.addr %s302, 2
          %s306 = sadd.s32 %s304, %s305
          %s307 = smul.addr %s306, 8
          %s308 = scalar_lea.vmem %s2, %s307
          %s309 = smul.u32 2, %s19
        $region65: #{masked_attention_forward.4} parent=15 // pred_fallthru
          _
      $region16: #{masked_attention_forward.4} parent=5 // pred_fallthru
        _
      %p310 = scmp.le.s32.totalorder 1, %s11
      %p311 = scmp.lt.s32.totalorder %s11, 3
      %p312 = pnand %p310, %p311
      %p313 = pneg %p312
      // Predicated region
      $region66: #{masked_attention_forward.4} parent=5 // pred_check
        _
      $region67: #{masked_attention_forward.4} parent=5 // pred_check_branch
        %315 = sbr.rel (%p312) target = $region69
      $region68: #{masked_attention_forward.4} parent=5 // pred_region
        %s316 = ssub.s32 %s11, 1
        %s317 = sand.u32 %s64, 1
        %s318 = sand.u32 %s64, 1
        %s319 = smul.addr %s318, 64
        %s320 = scalar_lea.vmem [#allocation2], %s319
        // Predicated region
        $region70: #{masked_attention_forward.4} parent=68 // pred_check
          %p321 = pneg %p77
        $region71: #{masked_attention_forward.4} parent=68 // pred_check_branch
          %323 = sbr.rel (%p321) target = $region73
        $region72: #{masked_attention_forward.4} parent=68 // pred_region
          _
        $region73: #{masked_attention_forward.4} parent=68 // pred_fallthru
          _
        %s324 = sadd.s32 %s20, %s21
        %s325 = smul.u32 2, %s324
        %p326 = scmp.lt.s32.totalorder %s325, 3
        %s327 = scalar_select %p326, %s325, 3
        %s328 = smul.addr %s327, 4
        %s329 = scalar_lea.vmem %s0, %s328
        %p330 = pneg %p51
        %p331 = pneg %p48
        %s332 = sand.u32 %s64, 1
        %s333 = sand.u32 %s64, 1
        %s334 = smul.addr %s333, 64
        %s335 = scalar_lea.vmem [#allocation2], %s334
        %p336 = pneg %p77
        %p337 = pneg %p74
        %s338 = smul.u32 2, %s21
        %p339 = scmp.lt.s32.totalorder %s20, 1
        %s340 = scalar_select %p339, %s20, 1
        %p341 = scmp.lt.s32.totalorder %s338, 1
        %s342 = scalar_select %p341, %s338, 1
        %s343 = smul.addr %s340, 2
        %s344 = sadd.s32 %s342, %s343
        %s345 = smul.addr %s344, 8
        %s346 = scalar_lea.vmem %s2, %s345
        %p347 = pneg %p105
        %p348 = pneg %p102
        %p349 = pneg %p133
        %p350 = pneg %p130
        %s351 = smul.u32 2, %s21
        %p352 = scmp.lt.s32.totalorder %s20, 1
        %s353 = scalar_select %p352, %s20, 1
        %p354 = scmp.lt.s32.totalorder %s351, 1
        %s355 = scalar_select %p354, %s351, 1
        %s356 = smul.addr %s353, 2
        %s357 = sadd.s32 %s355, %s356
        %s358 = smul.addr %s357, 8
        %s359 = scalar_lea.vmem %s3, %s358
        %p360 = pneg %p159
        %p361 = pneg %p156
        %p362 = scmp.lt.s32.totalorder %s20, 1
        %s363 = scalar_select %p362, %s20, 1
        %s364 = scalar_lea.vmem %s4, %s363
        %s365 = sadd.s32 %s20, %s21
        %s366 = smul.u32 2, %s365
        %p367 = scmp.lt.s32.totalorder %s366, 3
        %s368 = scalar_select %p367, %s366, 3
        %s369 = smul.addr %s368, 4
        %s370 = scalar_lea.vmem %s0, %s369
        %s371 = sadd.s32 %s20, %s21
        %s372 = smul.u32 2, %s371
        %s373 = smul.u32 2, %s21
        %p374 = scmp.lt.s32.totalorder %s20, 1
        %s375 = scalar_select %p374, %s20, 1
        %p376 = scmp.lt.s32.totalorder %s373, 1
        %s377 = scalar_select %p376, %s373, 1
        %s378 = smul.addr %s375, 2
        %s379 = sadd.s32 %s377, %s378
        %s380 = smul.addr %s379, 8
        %s381 = scalar_lea.vmem %s2, %s380
        %s382 = smul.u32 2, %s21
        %s383 = smul.u32 2, %s21
        %p384 = scmp.lt.s32.totalorder %s20, 1
        %s385 = scalar_select %p384, %s20, 1
        %p386 = scmp.lt.s32.totalorder %s383, 1
        %s387 = scalar_select %p386, %s383, 1
        %s388 = smul.addr %s385, 2
        %s389 = sadd.s32 %s387, %s388
        %s390 = smul.addr %s389, 8
        %s391 = scalar_lea.vmem %s3, %s390
        %s392 = smul.u32 2, %s21
        %p393 = scmp.lt.s32.totalorder %s20, 1
        %s394 = scalar_select %p393, %s20, 1
        %s395 = scalar_lea.vmem %s4, %s394
        %v397 = vld [vmem:[%s381] sm:$0xff]
        %v398 = vld [vmem:[%s381 + $0x8] sm:$0xff]
        %v399 = vld [vmem:[%s370] sm:$0xf]
        %v400 = vld [vmem:[%s370 + $0x4] sm:$0xf]
        %v401 = vld [vmem:[%s320] sm:$0xf]
        %v402 = vld [vmem:[%s320 + $0x4] sm:$0xf]
        %v403 = vld [vmem:[%s320 + $0x8] sm:$0xf]
        %v404 = vld [vmem:[%s320 + $0xc] sm:$0xf]
        %v405 = vld [vmem:[%s320 + $0x10] sm:$0xf]
        %v406 = vld [vmem:[%s320 + $0x14] sm:$0xf]
        %v407 = vld [vmem:[%s320 + $0x18] sm:$0xf]
        %v408 = vld [vmem:[%s320 + $0x1c] sm:$0xf]
        %v409 = vld [vmem:[%s320 + $0x20] sm:$0xf]
        %v410 = vld [vmem:[%s320 + $0x24] sm:$0xf]
        %v411 = vld [vmem:[%s320 + $0x28] sm:$0xf]
        %v412 = vld [vmem:[%s320 + $0x2c] sm:$0xf]
        %v413 = vld [vmem:[%s320 + $0x30] sm:$0xf]
        %v414 = vld [vmem:[%s320 + $0x34] sm:$0xf]
        %v415 = vld [vmem:[%s320 + $0x38] sm:$0xf]
        %v416 = vld [vmem:[%s320 + $0x3c] sm:$0xf]
        %v419 = vunpack.c.l.b16 %v399
        %v420 = vunpack.c.l.b16 %v400
        %v421 = vpack.c.b16 %v420, %v419
        %v439 = vunpack.c.l.b16 %v401
        %v440 = vunpack.c.l.b16 %v402
        %v441 = vunpack.c.l.b16 %v403
        %v442 = vunpack.c.l.b16 %v404
        %v443 = vunpack.c.l.b16 %v405
        %v444 = vunpack.c.l.b16 %v406
        %v445 = vunpack.c.l.b16 %v407
        %v446 = vunpack.c.l.b16 %v408
        %v447 = vunpack.c.l.b16 %v409
        %v448 = vunpack.c.l.b16 %v410
        %v449 = vunpack.c.l.b16 %v411
        %v450 = vunpack.c.l.b16 %v412
        %v451 = vunpack.c.l.b16 %v413
        %v452 = vunpack.c.l.b16 %v414
        %v453 = vunpack.c.l.b16 %v415
        %v454 = vunpack.c.l.b16 %v416
        %v455 = vpack.c.b16 %v440, %v439
        %v456 = vpack.c.b16 %v442, %v441
        %v457 = vpack.c.b16 %v444, %v443
        %v458 = vpack.c.b16 %v446, %v445
        %v459 = vpack.c.b16 %v448, %v447
        %v460 = vpack.c.b16 %v450, %v449
        %v461 = vpack.c.b16 %v452, %v451
        %v462 = vpack.c.b16 %v454, %v453
        %471 = vmatprep.subr.bf16.mxu0 0
        %472 = vmatpush1.bf16.msra.mxu0 %v455
        %473 = vmatprep.subr.bf16.mxu0 0
        %474 = vmatpush1.bf16.msra.mxu0 %v456
        %475 = vmatprep.subr.bf16.mxu0 0
        %476 = vmatpush1.bf16.msra.mxu0 %v457
        %477 = vmatprep.subr.bf16.mxu0 0
        %478 = vmatpush1.bf16.msra.mxu0 %v458
        %479 = vmatprep.subr.bf16.mxu0 0
        %480 = vmatpush1.bf16.msra.mxu0 %v459
        %481 = vmatprep.subr.bf16.mxu0 0
        %482 = vmatpush1.bf16.msra.mxu0 %v460
        %483 = vmatprep.subr.bf16.mxu0 0
        %484 = vmatpush1.bf16.msra.mxu0 %v461
        %485 = vmatprep.subr.bf16.mxu0 0
        %486 = vmatpush1.bf16.msra.mxu0 %v462
        %487 = vmatprep.subr.bf16.mxu0 0
        %488 = vmatpush1.bf16.msra.mxu0 0
        %489 = vmatprep.subr.bf16.mxu0 0
        %490 = vmatpush1.bf16.msra.mxu0 0
        %491 = vmatprep.subr.bf16.mxu0 0
        %492 = vmatpush1.bf16.msra.mxu0 0
        %493 = vmatprep.subr.bf16.mxu0 0
        %494 = vmatpush1.bf16.msra.mxu0 0
        %495 = vmatprep.subr.bf16.mxu0 0
        %496 = vmatpush1.bf16.msra.mxu0 0
        %497 = vmatprep.subr.bf16.mxu0 0
        %498 = vmatpush1.bf16.msra.mxu0 0
        %499 = vmatprep.subr.bf16.mxu0 0
        %500 = vmatpush1.bf16.msra.mxu0 0
        %501 = vmatprep.subr.bf16.mxu0 0
        %502 = vmatpush1.bf16.msra.mxu0 0
        %503 = vmatprep.mubr.bf16.mxu0 0
        %504 = vmatmul.mubr.bf16.gmra.mrb[0].mxu0 %v421
        %v505 = vpop.f32.mrb[0].mxu0
        %v506 = vadd.f32 0.0, %v505
        %v507 = vpop.f32.mrb[0].mxu0
        %v508 = vpop.f32.mrb[0].mxu0
        %v509 = vadd.f32 0.0, %v508
        %v510 = vpop.f32.mrb[0].mxu0
        %511 = vdwg.mxu0
        %vm512 = vcmp.lt.f32.partialorder %v397, 1e-09
        %vm513 = vcmp.lt.f32.partialorder %v398, 1e-09
        %v514 = vsel %vm512, -1e+09, %v506
        %v515 = vsel %vm513, -1e+09, %v509
        %v516 = vlaneseq
        %v517 = vand.u32 %v516, 127
        %vm518 = vcmp.lt.s32.totalorder %v517, 16
        %v519 = vsel %vm518, %v514, -inf
        %v520 = vsel %vm518, %v515, -inf
        %521 = vmax.xlane.f32.xlu0 %v519
        %v522 = vpop.xlane.xlu0 %521
        %523 = vmax.xlane.f32.xlu0 %v520
        %v524 = vpop.xlane.xlu0 %523
        %v525 = vsub.f32 %v519, %v522
        %v526 = vsub.f32 %v520, %v524
        %v527 = vmul.f32 %v525, 1.442695
        %v528 = vpow.pop %v527
        %v529 = vmul.f32 %v526, 1.442695
        %v530 = vpow.pop %v529
        %531 = vadd.xlane.f32.xlu0 %v528
        %v532 = vpop.xlane.xlu0 %531
        %533 = vadd.xlane.f32.xlu0 %v530
        %v534 = vpop.xlane.xlu0 %533
        %v535 = vrcp.pop %v532
        %v536 = vrcp.pop %v534
        %v537 = vmul.f32 %v528, %v535
        %v538 = vmul.f32 %v530, %v536
        %v539 = vadd.f32 %v397, 1e-09
        %v540 = vadd.f32 %v398, 1e-09
        %v541 = vadd.f32 %v537, 1e-09
        %v542 = vadd.f32 %v538, 1e-09
        %v543 = vmul.f32 %v539, %v541
        %v544 = vmul.f32 %v540, %v542
        %v545 = vrsqrt.pop %v543
        %v546 = vmul.f32 %v543, %v545
        %vm547 = vcmp.eq.f32.partialorder %v543, inf
        %v548 = vsel %vm547, %v543, %v546
        %vm549 = vcmp.eq.f32.partialorder %v543, 0.0
        %v550 = vand.u32 %v543, 2147483648
        %v551 = vsel %vm549, %v550, %v548
        %v552 = vrsqrt.pop %v544
        %v553 = vmul.f32 %v544, %v552
        %vm554 = vcmp.eq.f32.partialorder %v544, inf
        %v555 = vsel %vm554, %v544, %v553
        %vm556 = vcmp.eq.f32.partialorder %v544, 0.0
        %v557 = vand.u32 %v544, 2147483648
        %v558 = vsel %vm556, %v557, %v555
        %v559 = vsub.f32 %v551, 1e-09
        %v560 = vsub.f32 %v558, 1e-09
        %s561 = smul.u32 %s21, 16
        %v562 = vlaneseq
        %v563 = vshrl.u32 %v562, 7
        %v564 = vadd.s32 %v563, 8
        %v565 = vstv %s561
        %v566 = vadd.s32 %v565, %v563
        %v567 = vadd.s32 %v565, %v564
        %vm568 = vcmp.lt.s32.totalorder %v566, 8
        %vm569 = vcmp.lt.s32.totalorder %v567, 8
        %vm570 = vmand %vm518, %vm568
        %vm571 = vmand %vm518, %vm569
        %v572 = vsel %vm570, %v559, 0.0
        %v573 = vsel %vm571, %v560, 0.0
        %574 = vst [vmem:[%s391] sm:$0xff] %v572
        %575 = vst [vmem:[%s391 + $0x8] sm:$0xff] %v573
        %p576 = scmp.eq.s32.totalorder %s21, 0
        // Predicated region
        $region74: #{masked_attention_forward.4} parent=68 // pred_check
          %p577 = pneg %p576
        $region75: #{masked_attention_forward.4} parent=68 // pred_check_branch
          %579 = sbr.rel (%p577) target = $region77
        $region76: #{masked_attention_forward.4} parent=68 // pred_region
          %580 = vst [vmem:[%s395] sm:$0x1] 0.0
        $region77: #{masked_attention_forward.4} parent=68 // pred_fallthru
          _
        %v581 = vld [vmem:[%s395] sm:$0x1]
        %v582 = vadd.f32 %v572, %v573
        %v583 = vrot.slane %v582, 4
        %v584 = vadd.f32 %v582, %v583
        %v585 = vrot.slane %v584, 2
        %v586 = vadd.f32 %v584, %v585
        %v587 = vrot.slane %v586, 1
        %v588 = vadd.f32 %v586, %v587
        %v589 = vadd.f32 %v581, %v588
        %590 = vst [vmem:[%s395] sm:$0x1] %v589
        %s591 = smul.u32 2, %s21
        %p592 = scmp.lt.s32.totalorder %s20, 1
        %s593 = scalar_select %p592, %s20, 1
        %p594 = scmp.lt.s32.totalorder %s591, 1
        %s595 = scalar_select %p594, %s591, 1
        %s596 = smul.addr %s593, 2
        %s597 = sadd.s32 %s595, %s596
        %s598 = smul.addr %s597, 8
        %s599 = scalar_lea.vmem %s3, %s598
        %p600 = scmp.lt.s32.totalorder %s20, 1
        %s601 = scalar_select %p600, %s20, 1
        %s602 = scalar_lea.vmem %s4, %s601
        // Predicated region
        $region78: #{masked_attention_forward.4} parent=68 // pred_check
          %p603 = pneg %p130
        $region79: #{masked_attention_forward.4} parent=68 // pred_check_branch
          %605 = sbr.rel (%p603) target = $region81
        $region80: #{masked_attention_forward.4} parent=68 // pred_region
          %s606 = smul.u32 2, %s21
        $region81: #{masked_attention_forward.4} parent=68 // pred_fallthru
          _
        // Predicated region
        $region82: #{masked_attention_forward.4} parent=68 // pred_check
          %p607 = pneg %p156
        $region83: #{masked_attention_forward.4} parent=68 // pred_check_branch
          %609 = sbr.rel (%p607) target = $region85
        $region84: #{masked_attention_forward.4} parent=68 // pred_region
          _
        $region85: #{masked_attention_forward.4} parent=68 // pred_fallthru
          _
      $region69: #{masked_attention_forward.4} parent=5 // pred_fallthru
        _
      %p610 = scmp.le.s32.totalorder 2, %s11
      // Predicated region
      $region86: #{masked_attention_forward.4} parent=5 // pred_check
        %p611 = pneg %p610
      $region87: #{masked_attention_forward.4} parent=5 // pred_check_branch
        %613 = sbr.rel (%p611) target = $region89
      $region88: #{masked_attention_forward.4} parent=5 // pred_region
        %s614 = ssub.s32 %s11, 2
        // Predicated region
        $region90: #{masked_attention_forward.4} parent=88 // pred_check
          %p615 = pneg %p136
        $region91: #{masked_attention_forward.4} parent=88 // pred_check_branch
          %617 = sbr.rel (%p615) target = $region93
        $region92: #{masked_attention_forward.4} parent=88 // pred_region
          %s618 = smul.u32 2, %s23
          %p619 = scmp.lt.s32.totalorder %s22, 1
          %s620 = scalar_select %p619, %s22, 1
          %p621 = scmp.lt.s32.totalorder %s618, 1
          %s622 = scalar_select %p621, %s618, 1
          %s623 = smul.addr %s620, 2
          %s624 = sadd.s32 %s622, %s623
          %s625 = smul.addr %s624, 8
          %s626 = scalar_lea.vmem %s3, %s625
        $region93: #{masked_attention_forward.4} parent=88 // pred_fallthru
          _
        // Predicated region
        $region94: #{masked_attention_forward.4} parent=88 // pred_check
          %p627 = pneg %p162
        $region95: #{masked_attention_forward.4} parent=88 // pred_check_branch
          %629 = sbr.rel (%p627) target = $region97
        $region96: #{masked_attention_forward.4} parent=88 // pred_region
          %p630 = scmp.lt.s32.totalorder %s22, 1
          %s631 = scalar_select %p630, %s22, 1
          %s632 = scalar_lea.vmem %s4, %s631
        $region97: #{masked_attention_forward.4} parent=88 // pred_fallthru
          _
      $region89: #{masked_attention_forward.4} parent=5 // pred_fallthru
        _
    $region6: #{masked_attention_forward.4} parent=1 // loop_footer
      %s15 = sadd.s32 1, %s11
    $region7: #{masked_attention_forward.4} parent=1 // loop_footer_branch
      %10 = sbr.rel target = $region3
    $region8: #{masked_attention_forward.4} parent=1 // loop_exit
      _

// kernel: masked_attention_forward.3
$region0: #{masked_attention_forward.3}
  #allocation0 [shape = 'u32[]', space=smem, size = 0x4, offset = 0x4, fixed_abs, tag = 'smem constant byte address 0x4 - core index']
  #allocation1 [shape = 'u32[144,128]{1,0:T(1,128)}', space=vmem, size = 0x12000, scoped, tag = 'internal scratch']
  %s0 = inlined_call_operand.vmem [shape: f32[32,8], index: 0, kind: input, shape index: {}]
  %s1 = inlined_call_operand.vmem [shape: f32[8,256], index: 1, kind: input, shape index: {}]
  %s2 = inlined_call_operand.vmem [shape: f32[8,128], index: 2, kind: input, shape index: {}]
  %s3 = inlined_call_operand.vmem [shape: f32[128,8], index: 3, kind: input, shape index: {}]
  %s4 = inlined_call_operand.vmem [shape: f32[1,128], index: 4, kind: input, shape index: {}]
  %s5 = inlined_call_operand.vmem [shape: f32[1,128], index: 5, kind: input, shape index: {}]
  %s6 = inlined_call_operand.vmem [shape: f32[128,1], index: 6, kind: input, shape index: {}]
  %s7 = inlined_call_operand.vmem [shape: f32[128,1], index: 7, kind: input, shape index: {}]
  %s8 = inlined_call_operand.vmem [shape: bf16[32,128], index: 8, kind: output, shape index: {0}]
  %s9 = inlined_call_operand.vmem [shape: bf16[128,256], index: 9, kind: output, shape index: {1}]
  %10 = xla_tuple %s8, %s9
  %s11 = sld [smem:[#allocation0]]
  $region50: #{masked_attention_forward.3} parent=0
    _
  %s13 = ssub.s32 1, %s11
  %s14 = scalar_select 0, %s13, %s11
  // Predicated region
  $region2: #{masked_attention_forward.3} parent=0 // pred_check
    _
  $region3: #{masked_attention_forward.3} parent=0 // pred_check_branch
    %16 = sbr.rel (0) target = $region5
  $region4: #{masked_attention_forward.3} parent=0 // pred_region
    _
  $region5: #{masked_attention_forward.3} parent=0 // pred_fallthru
    _
  // Predicated region
  $region6: #{masked_attention_forward.3} parent=0 // pred_check
    _
  $region7: #{masked_attention_forward.3} parent=0 // pred_check_branch
    %18 = sbr.rel (0) target = $region9
  $region8: #{masked_attention_forward.3} parent=0 // pred_region
    _
  $region9: #{masked_attention_forward.3} parent=0 // pred_fallthru
    _
  // Predicated region
  $region10: #{masked_attention_forward.3} parent=0 // pred_check
    _
  $region11: #{masked_attention_forward.3} parent=0 // pred_check_branch
    %20 = sbr.rel (0) target = $region13
  $region12: #{masked_attention_forward.3} parent=0 // pred_region
    _
  $region13: #{masked_attention_forward.3} parent=0 // pred_fallthru
    _
  // Predicated region
  $region14: #{masked_attention_forward.3} parent=0 // pred_check
    _
  $region15: #{masked_attention_forward.3} parent=0 // pred_check_branch
    %22 = sbr.rel (0) target = $region17
  $region16: #{masked_attention_forward.3} parent=0 // pred_region
    _
  $region17: #{masked_attention_forward.3} parent=0 // pred_fallthru
    _
  // Predicated region
  $region18: #{masked_attention_forward.3} parent=0 // pred_check
    _
  $region19: #{masked_attention_forward.3} parent=0 // pred_check_branch
    %24 = sbr.rel (0) target = $region21
  $region20: #{masked_attention_forward.3} parent=0 // pred_region
    _
  $region21: #{masked_attention_forward.3} parent=0 // pred_fallthru
    _
  // Predicated region
  $region22: #{masked_attention_forward.3} parent=0 // pred_check
    _
  $region23: #{masked_attention_forward.3} parent=0 // pred_check_branch
    %26 = sbr.rel (0) target = $region25
  $region24: #{masked_attention_forward.3} parent=0 // pred_region
    _
  $region25: #{masked_attention_forward.3} parent=0 // pred_fallthru
    _
  // Predicated region
  $region26: #{masked_attention_forward.3} parent=0 // pred_check
    _
  $region27: #{masked_attention_forward.3} parent=0 // pred_check_branch
    %28 = sbr.rel (0) target = $region29
  $region28: #{masked_attention_forward.3} parent=0 // pred_region
    _
  $region29: #{masked_attention_forward.3} parent=0 // pred_fallthru
    _
  // Predicated region
  $region30: #{masked_attention_forward.3} parent=0 // pred_check
    _
  $region31: #{masked_attention_forward.3} parent=0 // pred_check_branch
    %30 = sbr.rel (0) target = $region33
  $region32: #{masked_attention_forward.3} parent=0 // pred_region
    _
  $region33: #{masked_attention_forward.3} parent=0 // pred_fallthru
    _
  %v31 = vld [vmem:[%s0] sm:$0xff]
  %v32 = vld [vmem:[%s0 + $0x8] sm:$0xff]
  %v33 = vld [vmem:[%s0 + $0x10] sm:$0xff]
  %v34 = vld [vmem:[%s0 + $0x18] sm:$0xff]
  %v35 = vld [vmem:[%s2] sm:$0xff]
  %vm36 = vcmask 64512
  %v38 = vsel %vm36, %v31, 0
  %v41 = vsel %vm36, %v32, 0
  %v44 = vsel %vm36, %v33, 0
  %v47 = vsel %vm36, %v34, 0
  %49 = vmatprep.subr.mxu0 0.0
  %50 = vmatpush1.msra.mxu0 %v35
  %51 = vmatprep.subr.mxu0 0.0
  %52 = vmatpush1.msra.mxu0 0.0
  %53 = vmatprep.subr.mxu0 0.0
  %54 = vmatpush1.msra.mxu0 0.0
  %55 = vmatprep.subr.mxu0 0.0
  %56 = vmatpush1.msra.mxu0 0.0
  %57 = vmatprep.subr.mxu0 0.0
  %58 = vmatpush1.msra.mxu0 0.0
  %59 = vmatprep.subr.mxu0 0.0
  %60 = vmatpush1.msra.mxu0 0.0
  %61 = vmatprep.subr.mxu0 0.0
  %62 = vmatpush1.msra.mxu0 0.0
  %63 = vmatprep.subr.mxu0 0.0
  %64 = vmatpush1.msra.mxu0 0.0
  %65 = vmatprep.subr.mxu0 0.0
  %66 = vmatpush1.msra.mxu0 0.0
  %67 = vmatprep.subr.mxu0 0.0
  %68 = vmatpush1.msra.mxu0 0.0
  %69 = vmatprep.subr.mxu0 0.0
  %70 = vmatpush1.msra.mxu0 0.0
  %71 = vmatprep.subr.mxu0 0.0
  %72 = vmatpush1.msra.mxu0 0.0
  %73 = vmatprep.subr.mxu0 0.0
  %74 = vmatpush1.msra.mxu0 0.0
  %75 = vmatprep.subr.mxu0 0.0
  %76 = vmatpush1.msra.mxu0 0.0
  %77 = vmatprep.subr.mxu0 0.0
  %78 = vmatpush1.msra.mxu0 0.0
  %79 = vmatprep.subr.mxu0 0.0
  %80 = vmatpush1.msra.mxu0 0.0
  %81 = vmatprep.subr.mxu0 0.0
  %82 = vmatpush1.msra.mxu0 0.0
  %83 = vmatprep.subr.mxu0 0.0
  %84 = vmatpush1.msra.mxu0 0.0
  %85 = vmatprep.subr.mxu0 0.0
  %86 = vmatpush1.msra.mxu0 0.0
  %87 = vmatprep.subr.mxu0 0.0
  %88 = vmatpush1.msra.mxu0 0.0
  %89 = vmatprep.subr.mxu0 0.0
  %90 = vmatpush1.msra.mxu0 0.0
  %91 = vmatprep.subr.mxu0 0.0
  %92 = vmatpush1.msra.mxu0 0.0
  %93 = vmatprep.subr.mxu0 0.0
  %94 = vmatpush1.msra.mxu0 0.0
  %95 = vmatprep.subr.mxu0 0.0
  %96 = vmatpush1.msra.mxu0 0.0
  %97 = vmatprep.subr.mxu0 0.0
  %98 = vmatpush1.msra.mxu0 0.0
  %99 = vmatprep.subr.mxu0 0.0
  %100 = vmatpush1.msra.mxu0 0.0
  %101 = vmatprep.subr.mxu0 0.0
  %102 = vmatpush1.msra.mxu0 0.0
  %103 = vmatprep.subr.mxu0 0.0
  %104 = vmatpush1.msra.mxu0 0.0
  %105 = vmatprep.subr.mxu0 0.0
  %106 = vmatpush1.msra.mxu0 0.0
  %107 = vmatprep.subr.mxu0 0.0
  %108 = vmatpush1.msra.mxu0 0.0
  %109 = vmatprep.subr.mxu0 0.0
  %110 = vmatpush1.msra.mxu0 0.0
  %111 = vmatprep.subr.mxu0 0.0
  %112 = vmatpush1.msra.mxu0 0.0
  %113 = vmatprep.mubr.f32.mxu0 0.0
  %114 = vmatmul.mubr.f32.gmra.mrb[0].mxu0 %v38
  %v115 = vpop.f32.mrb[0].mxu0
  %v116 = vadd.f32 0.0, %v115
  %v117 = vpop.f32.mrb[0].mxu0
  %118 = vmatprep.mubr.f32.mxu0 0.0
  %119 = vmatmul.mubr.f32.gmra.mrb[0].mxu0 %v41
  %v120 = vpop.f32.mrb[0].mxu0
  %v121 = vadd.f32 0.0, %v120
  %v122 = vpop.f32.mrb[0].mxu0
  %123 = vmatprep.mubr.f32.mxu0 0.0
  %124 = vmatmul.mubr.f32.gmra.mrb[0].mxu0 %v44
  %v125 = vpop.f32.mrb[0].mxu0
  %v126 = vadd.f32 0.0, %v125
  %v127 = vpop.f32.mrb[0].mxu0
  %128 = vmatprep.mubr.f32.mxu0 0.0
  %129 = vmatmul.mubr.f32.gmra.mrb[0].mxu0 %v47
  %v130 = vpop.f32.mrb[0].mxu0
  %v131 = vadd.f32 0.0, %v130
  %v132 = vpop.f32.mrb[0].mxu0
  %133 = vdwg.mxu0
  %v134 = vadd.f32 %v116, %v121
  %v135 = vadd.f32 %v134, %v126
  %v136 = vadd.f32 %v135, %v131
  %v137 = vrot.slane %v136, 4
  %v138 = vadd.f32 %v136, %v137
  %v139 = vrot.slane %v138, 2
  %v140 = vadd.f32 %v138, %v139
  %v141 = vrot.slane %v140, 1
  %v142 = vadd.f32 %v140, %v141
  %v143 = vmul.f32 %v142, 0.0625
  %v144 = vsub.f32 %v116, %v143
  %v145 = vsub.f32 %v121, %v143
  %v146 = vsub.f32 %v126, %v143
  %v147 = vsub.f32 %v131, %v143
  %v148 = vmul.f32 %v144, %v144
  %v149 = vmul.f32 %v145, %v145
  %v150 = vmul.f32 %v146, %v146
  %v151 = vmul.f32 %v147, %v147
  %v152 = vadd.f32 %v148, %v149
  %v153 = vadd.f32 %v152, %v150
  %v154 = vadd.f32 %v153, %v151
  %v155 = vrot.slane %v154, 4
  %v156 = vadd.f32 %v154, %v155
  %v157 = vrot.slane %v156, 2
  %v158 = vadd.f32 %v156, %v157
  %v159 = vrot.slane %v158, 1
  %v160 = vadd.f32 %v158, %v159
  %v161 = vmul.f32 %v143, 16.0
  %v162 = vmul.f32 %v161, %v143
  %v163 = vsub.f32 %v160, %v162
  %v164 = vmul.f32 %v163, 0.0625
  %v165 = vld [vmem:[%s4] sm:$0x1]
  %v166 = vmax.f32 %v164, 0.0
  %v167 = vadd.f32 %v166, 1e-05
  %v168 = vrsqrt.pop %v167
  %v169 = vmul.f32 %v165, %v168
  %v170 = vld [vmem:[%s5] sm:$0x1]
  %v171 = vmul.f32 %v143, %v169
  %v172 = vsub.f32 %v170, %v171
  %v174 = vlaneseq
  %v175 = vshrl.u32 %v174, 7
  %v176 = vsub.s32 0, %v175
  %v177 = vrot.slane %v169, %v176
  %v179 = vmul.f32 %v116, %v177
  %v180 = vmul.f32 %v121, %v177
  %v181 = vmul.f32 %v126, %v177
  %v182 = vmul.f32 %v131, %v177
  %v184 = vlaneseq
  %v185 = vshrl.u32 %v184, 7
  %v186 = vsub.s32 0, %v185
  %v187 = vrot.slane %v172, %v186
  %v189 = vadd.f32 %v179, %v187
  %v190 = vadd.f32 %v180, %v187
  %v191 = vadd.f32 %v181, %v187
  %v192 = vadd.f32 %v182, %v187
  %v193 = vpack.c.bf16 %v190, %v189
  %v194 = vpack.c.bf16 %v192, %v191
  %v197 = vunpack.c.l.b16 %v193
  %v198 = vunpack.c.h.b16 %v193
  %v199 = vunpack.c.l.b16 %v194
  %v200 = vunpack.c.h.b16 %v194
  %v201 = vpack.c.b16 %v197, %v197
  %v202 = vpack.c.b16 %v198, %v198
  %v203 = vpack.c.b16 %v199, %v199
  %v204 = vpack.c.b16 %v200, %v200
  %209 = vst [vmem:[%s8] sm:$0xf] %v201
  %210 = vst [vmem:[%s8 + $0x4] sm:$0xf] %v202
  %211 = vst [vmem:[%s8 + $0x8] sm:$0xf] %v203
  %212 = vst [vmem:[%s8 + $0xc] sm:$0xf] %v204
  %v213 = vld [vmem:[%s3] sm:$0xff]
  %v214 = vld [vmem:[%s3 + $0x8] sm:$0xff]
  %v215 = vld [vmem:[%s3 + $0x10] sm:$0xff]
  %v216 = vld [vmem:[%s3 + $0x18] sm:$0xff]
  %v217 = vld [vmem:[%s3 + $0x20] sm:$0xff]
  %v218 = vld [vmem:[%s3 + $0x28] sm:$0xff]
  %v219 = vld [vmem:[%s3 + $0x30] sm:$0xff]
  %v220 = vld [vmem:[%s3 + $0x38] sm:$0xff]
  %v221 = vld [vmem:[%s3 + $0x40] sm:$0xff]
  %v222 = vld [vmem:[%s3 + $0x48] sm:$0xff]
  %v223 = vld [vmem:[%s3 + $0x50] sm:$0xff]
  %v224 = vld [vmem:[%s3 + $0x58] sm:$0xff]
  %v225 = vld [vmem:[%s3 + $0x60] sm:$0xff]
  %v226 = vld [vmem:[%s3 + $0x68] sm:$0xff]
  %v227 = vld [vmem:[%s3 + $0x70] sm:$0xff]
  %v228 = vld [vmem:[%s3 + $0x78] sm:$0xff]
  %v229 = vld [vmem:[%s1] sm:$0xff]
  %v230 = vld [vmem:[%s1 + $0x8] sm:$0xff]
  %v232 = vsel %vm36, %v213, 0
  %v235 = vsel %vm36, %v214, 0
  %v238 = vsel %vm36, %v215, 0
  %v241 = vsel %vm36, %v216, 0
  %v244 = vsel %vm36, %v217, 0
  %v247 = vsel %vm36, %v218, 0
  %v250 = vsel %vm36, %v219, 0
  %v253 = vsel %vm36, %v220, 0
  %v256 = vsel %vm36, %v221, 0
  %v259 = vsel %vm36, %v222, 0
  %v262 = vsel %vm36, %v223, 0
  %v265 = vsel %vm36, %v224, 0
  %v268 = vsel %vm36, %v225, 0
  %v271 = vsel %vm36, %v226, 0
  %v274 = vsel %vm36, %v227, 0
  %v277 = vsel %vm36, %v228, 0
  %279 = vmatprep.subr.mxu0 %v230
  %280 = vmatpush1.msra.mxu0 %v229
  %281 = vmatprep.subr.mxu0 0.0
  %282 = vmatpush1.msra.mxu0 0.0
  %283 = vmatprep.subr.mxu0 0.0
  %284 = vmatpush1.msra.mxu0 0.0
  %285 = vmatprep.subr.mxu0 0.0
  %286 = vmatpush1.msra.mxu0 0.0
  %287 = vmatprep.subr.mxu0 0.0
  %288 = vmatpush1.msra.mxu0 0.0
  %289 = vmatprep.subr.mxu0 0.0
  %290 = vmatpush1.msra.mxu0 0.0
  %291 = vmatprep.subr.mxu0 0.0
  %292 = vmatpush1.msra.mxu0 0.0
  %293 = vmatprep.subr.mxu0 0.0
  %294 = vmatpush1.msra.mxu0 0.0
  %295 = vmatprep.subr.mxu0 0.0
  %296 = vmatpush1.msra.mxu0 0.0
  %297 = vmatprep.subr.mxu0 0.0
  %298 = vmatpush1.msra.mxu0 0.0
  %299 = vmatprep.subr.mxu0 0.0
  %300 = vmatpush1.msra.mxu0 0.0
  %301 = vmatprep.subr.mxu0 0.0
  %302 = vmatpush1.msra.mxu0 0.0
  %303 = vmatprep.subr.mxu0 0.0
  %304 = vmatpush1.msra.mxu0 0.0
  %305 = vmatprep.subr.mxu0 0.0
  %306 = vmatpush1.msra.mxu0 0.0
  %307 = vmatprep.subr.mxu0 0.0
  %308 = vmatpush1.msra.mxu0 0.0
  %309 = vmatprep.subr.mxu0 0.0
  %310 = vmatpush1.msra.mxu0 0.0
  %311 = vmatprep.subr.mxu0 0.0
  %312 = vmatpush1.msra.mxu0 0.0
  %313 = vmatprep.subr.mxu0 0.0
  %314 = vmatpush1.msra.mxu0 0.0
  %315 = vmatprep.subr.mxu0 0.0
  %316 = vmatpush1.msra.mxu0 0.0
  %317 = vmatprep.subr.mxu0 0.0
  %318 = vmatpush1.msra.mxu0 0.0
  %319 = vmatprep.subr.mxu0 0.0
  %320 = vmatpush1.msra.mxu0 0.0
  %321 = vmatprep.subr.mxu0 0.0
  %322 = vmatpush1.msra.mxu0 0.0
  %323 = vmatprep.subr.mxu0 0.0
  %324 = vmatpush1.msra.mxu0 0.0
  %325 = vmatprep.subr.mxu0 0.0
  %326 = vmatpush1.msra.mxu0 0.0
  %327 = vmatprep.subr.mxu0 0.0
  %328 = vmatpush1.msra.mxu0 0.0
  %329 = vmatprep.subr.mxu0 0.0
  %330 = vmatpush1.msra.mxu0 0.0
  %331 = vmatprep.subr.mxu0 0.0
  %332 = vmatpush1.msra.mxu0 0.0
  %333 = vmatprep.subr.mxu0 0.0
  %334 = vmatpush1.msra.mxu0 0.0
  %335 = vmatprep.subr.mxu0 0.0
  %336 = vmatpush1.msra.mxu0 0.0
  %337 = vmatprep.subr.mxu0 0.0
  %338 = vmatpush1.msra.mxu0 0.0
  %339 = vmatprep.subr.mxu0 0.0
  %340 = vmatpush1.msra.mxu0 0.0
  %341 = vmatprep.subr.mxu0 0.0
  %342 = vmatpush1.msra.mxu0 0.0
  %343 = vmatprep.mubr.f32.mxu0 0.0
  %344 = vmatmul.mubr.f32.gmra.mrb[0].mxu0 %v232
  %v345 = vpop.f32.mrb[0].mxu0
  %v346 = vadd.f32 0.0, %v345
  %v347 = vpop.f32.mrb[0].mxu0
  %v348 = vadd.f32 0.0, %v347
  %349 = vmatprep.mubr.f32.mxu0 0.0
  %350 = vmatmul.mubr.f32.gmra.mrb[0].mxu0 %v235
  %v351 = vpop.f32.mrb[0].mxu0
  %v352 = vadd.f32 0.0, %v351
  %v353 = vpop.f32.mrb[0].mxu0
  %v354 = vadd.f32 0.0, %v353
  %355 = vmatprep.mubr.f32.mxu0 0.0
  %356 = vmatmul.mubr.f32.gmra.mrb[0].mxu0 %v238
  %v357 = vpop.f32.mrb[0].mxu0
  %v358 = vadd.f32 0.0, %v357
  %v359 = vpop.f32.mrb[0].mxu0
  %v360 = vadd.f32 0.0, %v359
  %361 = vmatprep.mubr.f32.mxu0 0.0
  %362 = vmatmul.mubr.f32.gmra.mrb[0].mxu0 %v241
  %v363 = vpop.f32.mrb[0].mxu0
  %v364 = vadd.f32 0.0, %v363
  %v365 = vpop.f32.mrb[0].mxu0
  %v366 = vadd.f32 0.0, %v365
  %367 = vmatprep.mubr.f32.mxu0 0.0
  %368 = vmatmul.mubr.f32.gmra.mrb[0].mxu0 %v244
  %v369 = vpop.f32.mrb[0].mxu0
  %v370 = vadd.f32 0.0, %v369
  %v371 = vpop.f32.mrb[0].mxu0
  %v372 = vadd.f32 0.0, %v371
  %373 = vmatprep.mubr.f32.mxu0 0.0
  %374 = vmatmul.mubr.f32.gmra.mrb[0].mxu0 %v247
  %v375 = vpop.f32.mrb[0].mxu0
  %v376 = vadd.f32 0.0, %v375
  %v377 = vpop.f32.mrb[0].mxu0
  %v378 = vadd.f32 0.0, %v377
  %379 = vmatprep.mubr.f32.mxu0 0.0
  %380 = vmatmul.mubr.f32.gmra.mrb[0].mxu0 %v250
  %v381 = vpop.f32.mrb[0].mxu0
  %v382 = vadd.f32 0.0, %v381
  %v383 = vpop.f32.mrb[0].mxu0
  %v384 = vadd.f32 0.0, %v383
  %385 = vmatprep.mubr.f32.mxu0 0.0
  %386 = vmatmul.mubr.f32.gmra.mrb[0].mxu0 %v253
  %v387 = vpop.f32.mrb[0].mxu0
  %v388 = vadd.f32 0.0, %v387
  %v389 = vpop.f32.mrb[0].mxu0
  %v390 = vadd.f32 0.0, %v389
  %391 = vmatprep.mubr.f32.mxu0 0.0
  %392 = vmatmul.mubr.f32.gmra.mrb[0].mxu0 %v256
  %v393 = vpop.f32.mrb[0].mxu0
  %v394 = vadd.f32 0.0, %v393
  %v395 = vpop.f32.mrb[0].mxu0
  %v396 = vadd.f32 0.0, %v395
  %397 = vmatprep.mubr.f32.mxu0 0.0
  %398 = vmatmul.mubr.f32.gmra.mrb[0].mxu0 %v259
  %v399 = vpop.f32.mrb[0].mxu0
  %v400 = vadd.f32 0.0, %v399
  %v401 = vpop.f32.mrb[0].mxu0
  %v402 = vadd.f32 0.0, %v401
  %403 = vmatprep.mubr.f32.mxu0 0.0
  %404 = vmatmul.mubr.f32.gmra.mrb[0].mxu0 %v262
  %v405 = vpop.f32.mrb[0].mxu0
  %v406 = vadd.f32 0.0, %v405
  %v407 = vpop.f32.mrb[0].mxu0
  %v408 = vadd.f32 0.0, %v407
  %409 = vmatprep.mubr.f32.mxu0 0.0
  %410 = vmatmul.mubr.f32.gmra.mrb[0].mxu0 %v265
  %v411 = vpop.f32.mrb[0].mxu0
  %v412 = vadd.f32 0.0, %v411
  %v413 = vpop.f32.mrb[0].mxu0
  %v414 = vadd.f32 0.0, %v413
  %415 = vmatprep.mubr.f32.mxu0 0.0
  %416 = vmatmul.mubr.f32.gmra.mrb[0].mxu0 %v268
  %v417 = vpop.f32.mrb[0].mxu0
  %v418 = vadd.f32 0.0, %v417
  %v419 = vpop.f32.mrb[0].mxu0
  %v420 = vadd.f32 0.0, %v419
  %421 = vmatprep.mubr.f32.mxu0 0.0
  %422 = vmatmul.mubr.f32.gmra.mrb[0].mxu0 %v271
  %v423 = vpop.f32.mrb[0].mxu0
  %v424 = vadd.f32 0.0, %v423
  %v425 = vpop.f32.mrb[0].mxu0
  %v426 = vadd.f32 0.0, %v425
  %427 = vmatprep.mubr.f32.mxu0 0.0
  %428 = vmatmul.mubr.f32.gmra.mrb[0].mxu0 %v274
  %v429 = vpop.f32.mrb[0].mxu0
  %v430 = vadd.f32 0.0, %v429
  %v431 = vpop.f32.mrb[0].mxu0
  %v432 = vadd.f32 0.0, %v431
  %433 = vmatprep.mubr.f32.mxu0 0.0
  %434 = vmatmul.mubr.f32.gmra.mrb[0].mxu0 %v277
  %v435 = vpop.f32.mrb[0].mxu0
  %v436 = vadd.f32 0.0, %v435
  %v437 = vpop.f32.mrb[0].mxu0
  %v438 = vadd.f32 0.0, %v437
  %439 = vdwg.mxu0
  %v440 = vadd.f32 %v346, %v348
  %441 = vadd.xlane.f32.xlu0 %v440
  %v442 = vpop.xlane.xlu0 %441
  %v443 = vadd.f32 %v352, %v354
  %444 = vadd.xlane.f32.xlu0 %v443
  %v445 = vpop.xlane.xlu0 %444
  %v446 = vadd.f32 %v358, %v360
  %447 = vadd.xlane.f32.xlu0 %v446
  %v448 = vpop.xlane.xlu0 %447
  %v449 = vadd.f32 %v364, %v366
  %450 = vadd.xlane.f32.xlu0 %v449
  %v451 = vpop.xlane.xlu0 %450
  %v452 = vadd.f32 %v370, %v372
  %453 = vadd.xlane.f32.xlu0 %v452
  %v454 = vpop.xlane.xlu0 %453
  %v455 = vadd.f32 %v376, %v378
  %456 = vadd.xlane.f32.xlu0 %v455
  %v457 = vpop.xlane.xlu0 %456
  %v458 = vadd.f32 %v382, %v384
  %459 = vadd.xlane.f32.xlu0 %v458
  %v460 = vpop.xlane.xlu0 %459
  %v461 = vadd.f32 %v388, %v390
  %462 = vadd.xlane.f32.xlu0 %v461
  %v463 = vpop.xlane.xlu0 %462
  %v464 = vadd.f32 %v394, %v396
  %465 = vadd.xlane.f32.xlu0 %v464
  %v466 = vpop.xlane.xlu0 %465
  %v467 = vadd.f32 %v400, %v402
  %468 = vadd.xlane.f32.xlu0 %v467
  %v469 = vpop.xlane.xlu0 %468
  %v470 = vadd.f32 %v406, %v408
  %471 = vadd.xlane.f32.xlu0 %v470
  %v472 = vpop.xlane.xlu0 %471
  %v473 = vadd.f32 %v412, %v414
  %474 = vadd.xlane.f32.xlu0 %v473
  %v475 = vpop.xlane.xlu0 %474
  %v476 = vadd.f32 %v418, %v420
  %477 = vadd.xlane.f32.xlu0 %v476
  %v478 = vpop.xlane.xlu0 %477
  %v479 = vadd.f32 %v424, %v426
  %480 = vadd.xlane.f32.xlu0 %v479
  %v481 = vpop.xlane.xlu0 %480
  %v482 = vadd.f32 %v430, %v432
  %483 = vadd.xlane.f32.xlu0 %v482
  %v484 = vpop.xlane.xlu0 %483
  %v485 = vadd.f32 %v436, %v438
  %486 = vadd.xlane.f32.xlu0 %v485
  %v487 = vpop.xlane.xlu0 %486
  %v488 = vmul.f32 %v442, 0.03125
  %v489 = vmul.f32 %v445, 0.03125
  %v490 = vmul.f32 %v448, 0.03125
  %v491 = vmul.f32 %v451, 0.03125
  %v492 = vmul.f32 %v454, 0.03125
  %v493 = vmul.f32 %v457, 0.03125
  %v494 = vmul.f32 %v460, 0.03125
  %v495 = vmul.f32 %v463, 0.03125
  %v496 = vmul.f32 %v466, 0.03125
  %v497 = vmul.f32 %v469, 0.03125
  %v498 = vmul.f32 %v472, 0.03125
  %v499 = vmul.f32 %v475, 0.03125
  %v500 = vmul.f32 %v478, 0.03125
  %v501 = vmul.f32 %v481, 0.03125
  %v502 = vmul.f32 %v484, 0.03125
  %v503 = vmul.f32 %v487, 0.03125
  %v504 = vsub.f32 %v346, %v488
  %v505 = vsub.f32 %v348, %v488
  %v506 = vsub.f32 %v352, %v489
  %v507 = vsub.f32 %v354, %v489
  %v508 = vsub.f32 %v358, %v490
  %v509 = vsub.f32 %v360, %v490
  %v510 = vsub.f32 %v364, %v491
  %v511 = vsub.f32 %v366, %v491
  %v512 = vsub.f32 %v370, %v492
  %v513 = vsub.f32 %v372, %v492
  %v514 = vsub.f32 %v376, %v493
  %v515 = vsub.f32 %v378, %v493
  %v516 = vsub.f32 %v382, %v494
  %v517 = vsub.f32 %v384, %v494
  %v518 = vsub.f32 %v388, %v495
  %v519 = vsub.f32 %v390, %v495
  %v520 = vsub.f32 %v394, %v496
  %v521 = vsub.f32 %v396, %v496
  %v522 = vsub.f32 %v400, %v497
  %v523 = vsub.f32 %v402, %v497
  %v524 = vsub.f32 %v406, %v498
  %v525 = vsub.f32 %v408, %v498
  %v526 = vsub.f32 %v412, %v499
  %v527 = vsub.f32 %v414, %v499
  %v528 = vsub.f32 %v418, %v500
  %v529 = vsub.f32 %v420, %v500
  %v530 = vsub.f32 %v424, %v501
  %v531 = vsub.f32 %v426, %v501
  %v532 = vsub.f32 %v430, %v502
  %v533 = vsub.f32 %v432, %v502
  %v534 = vsub.f32 %v436, %v503
  %v535 = vsub.f32 %v438, %v503
  %v536 = vmul.f32 %v504, %v504
  %v537 = vmul.f32 %v505, %v505
  %v538 = vmul.f32 %v506, %v506
  %v539 = vmul.f32 %v507, %v507
  %v540 = vmul.f32 %v508, %v508
  %v541 = vmul.f32 %v509, %v509
  %v542 = vmul.f32 %v510, %v510
  %v543 = vmul.f32 %v511, %v511
  %v544 = vmul.f32 %v512, %v512
  %v545 = vmul.f32 %v513, %v513
  %v546 = vmul.f32 %v514, %v514
  %v547 = vmul.f32 %v515, %v515
  %v548 = vmul.f32 %v516, %v516
  %v549 = vmul.f32 %v517, %v517
  %v550 = vmul.f32 %v518, %v518
  %v551 = vmul.f32 %v519, %v519
  %v552 = vmul.f32 %v520, %v520
  %v553 = vmul.f32 %v521, %v521
  %v554 = vmul.f32 %v522, %v522
  %v555 = vmul.f32 %v523, %v523
  %v556 = vmul.f32 %v524, %v524
  %v557 = vmul.f32 %v525, %v525
  %v558 = vmul.f32 %v526, %v526
  %v559 = vmul.f32 %v527, %v527
  %v560 = vmul.f32 %v528, %v528
  %v561 = vmul.f32 %v529, %v529
  %v562 = vmul.f32 %v530, %v530
  %v563 = vmul.f32 %v531, %v531
  %v564 = vmul.f32 %v532, %v532
  %v565 = vmul.f32 %v533, %v533
  %v566 = vmul.f32 %v534, %v534
  %v567 = vmul.f32 %v535, %v535
  %v568 = vadd.f32 %v536, %v537
  %569 = vadd.xlane.f32.xlu0 %v568
  %v570 = vpop.xlane.xlu0 %569
  %v571 = vadd.f32 %v538, %v539
  %572 = vadd.xlane.f32.xlu0 %v571
  %v573 = vpop.xlane.xlu0 %572
  %v574 = vadd.f32 %v540, %v541
  %575 = vadd.xlane.f32.xlu0 %v574
  %v576 = vpop.xlane.xlu0 %575
  %v577 = vadd.f32 %v542, %v543
  %578 = vadd.xlane.f32.xlu0 %v577
  %v579 = vpop.xlane.xlu0 %578
  %v580 = vadd.f32 %v544, %v545
  %581 = vadd.xlane.f32.xlu0 %v580
  %v582 = vpop.xlane.xlu0 %581
  %v583 = vadd.f32 %v546, %v547
  %584 = vadd.xlane.f32.xlu0 %v583
  %v585 = vpop.xlane.xlu0 %584
  %v586 = vadd.f32 %v548, %v549
  %587 = vadd.xlane.f32.xlu0 %v586
  %v588 = vpop.xlane.xlu0 %587
  %v589 = vadd.f32 %v550, %v551
  %590 = vadd.xlane.f32.xlu0 %v589
  %v591 = vpop.xlane.xlu0 %590
  %v592 = vadd.f32 %v552, %v553
  %593 = vadd.xlane.f32.xlu0 %v592
  %v594 = vpop.xlane.xlu0 %593
  %v595 = vadd.f32 %v554, %v555
  %596 = vadd.xlane.f32.xlu0 %v595
  %v597 = vpop.xlane.xlu0 %596
  %v598 = vadd.f32 %v556, %v557
  %599 = vadd.xlane.f32.xlu0 %v598
  %v600 = vpop.xlane.xlu0 %599
  %v601 = vadd.f32 %v558, %v559
  %602 = vadd.xlane.f32.xlu0 %v601
  %v603 = vpop.xlane.xlu0 %602
  %v604 = vadd.f32 %v560, %v561
  %605 = vadd.xlane.f32.xlu0 %v604
  %v606 = vpop.xlane.xlu0 %605
  %v607 = vadd.f32 %v562, %v563
  %608 = vadd.xlane.f32.xlu0 %v607
  %v609 = vpop.xlane.xlu0 %608
  %v610 = vadd.f32 %v564, %v565
  %611 = vadd.xlane.f32.xlu0 %v610
  %v612 = vpop.xlane.xlu0 %611
  %v613 = vadd.f32 %v566, %v567
  %614 = vadd.xlane.f32.xlu0 %v613
  %v615 = vpop.xlane.xlu0 %614
  %v616 = vmul.f32 %v488, 224.0
  %v617 = vmul.f32 %v489, 224.0
  %v618 = vmul.f32 %v490, 224.0
  %v619 = vmul.f32 %v491, 224.0
  %v620 = vmul.f32 %v492, 224.0
  %v621 = vmul.f32 %v493, 224.0
  %v622 = vmul.f32 %v494, 224.0
  %v623 = vmul.f32 %v495, 224.0
  %v624 = vmul.f32 %v496, 224.0
  %v625 = vmul.f32 %v497, 224.0
  %v626 = vmul.f32 %v498, 224.0
  %v627 = vmul.f32 %v499, 224.0
  %v628 = vmul.f32 %v500, 224.0
  %v629 = vmul.f32 %v501, 224.0
  %v630 = vmul.f32 %v502, 224.0
  %v631 = vmul.f32 %v503, 224.0
  %v632 = vmul.f32 %v616, %v488
  %v633 = vmul.f32 %v617, %v489
  %v634 = vmul.f32 %v618, %v490
  %v635 = vmul.f32 %v619, %v491
  %v636 = vmul.f32 %v620, %v492
  %v637 = vmul.f32 %v621, %v493
  %v638 = vmul.f32 %v622, %v494
  %v639 = vmul.f32 %v623, %v495
  %v640 = vmul.f32 %v624, %v496
  %v641 = vmul.f32 %v625, %v497
  %v642 = vmul.f32 %v626, %v498
  %v643 = vmul.f32 %v627, %v499
  %v644 = vmul.f32 %v628, %v500
  %v645 = vmul.f32 %v629, %v501
  %v646 = vmul.f32 %v630, %v502
  %v647 = vmul.f32 %v631, %v503
  %v648 = vsub.f32 %v570, %v632
  %v649 = vsub.f32 %v573, %v633
  %v650 = vsub.f32 %v576, %v634
  %v651 = vsub.f32 %v579, %v635
  %v652 = vsub.f32 %v582, %v636
  %v653 = vsub.f32 %v585, %v637
  %v654 = vsub.f32 %v588, %v638
  %v655 = vsub.f32 %v591, %v639
  %v656 = vsub.f32 %v594, %v640
  %v657 = vsub.f32 %v597, %v641
  %v658 = vsub.f32 %v600, %v642
  %v659 = vsub.f32 %v603, %v643
  %v660 = vsub.f32 %v606, %v644
  %v661 = vsub.f32 %v609, %v645
  %v662 = vsub.f32 %v612, %v646
  %v663 = vsub.f32 %v615, %v647
  %v664 = vmul.f32 %v648, 0.03125
  %v665 = vmul.f32 %v649, 0.03125
  %v666 = vmul.f32 %v650, 0.03125
  %v667 = vmul.f32 %v651, 0.03125
  %v668 = vmul.f32 %v652, 0.03125
  %v669 = vmul.f32 %v653, 0.03125
  %v670 = vmul.f32 %v654, 0.03125
  %v671 = vmul.f32 %v655, 0.03125
  %v672 = vmul.f32 %v656, 0.03125
  %v673 = vmul.f32 %v657, 0.03125
  %v674 = vmul.f32 %v658, 0.03125
  %v675 = vmul.f32 %v659, 0.03125
  %v676 = vmul.f32 %v660, 0.03125
  %v677 = vmul.f32 %v661, 0.03125
  %v678 = vmul.f32 %v662, 0.03125
  %v679 = vmul.f32 %v663, 0.03125
  %v680 = vld [vmem:[%s6] sm:$0xff]
  %v681 = vld [vmem:[%s6 + $0x8] sm:$0xff]
  %v682 = vld [vmem:[%s6 + $0x10] sm:$0xff]
  %v683 = vld [vmem:[%s6 + $0x18] sm:$0xff]
  %v684 = vld [vmem:[%s6 + $0x20] sm:$0xff]
  %v685 = vld [vmem:[%s6 + $0x28] sm:$0xff]
  %v686 = vld [vmem:[%s6 + $0x30] sm:$0xff]
  %v687 = vld [vmem:[%s6 + $0x38] sm:$0xff]
  %v688 = vld [vmem:[%s6 + $0x40] sm:$0xff]
  %v689 = vld [vmem:[%s6 + $0x48] sm:$0xff]
  %v690 = vld [vmem:[%s6 + $0x50] sm:$0xff]
  %v691 = vld [vmem:[%s6 + $0x58] sm:$0xff]
  %v692 = vld [vmem:[%s6 + $0x60] sm:$0xff]
  %v693 = vld [vmem:[%s6 + $0x68] sm:$0xff]
  %v694 = vld [vmem:[%s6 + $0x70] sm:$0xff]
  %v695 = vld [vmem:[%s6 + $0x78] sm:$0xff]
  %v696 = vmax.f32 %v664, 0.0
  %v697 = vmax.f32 %v665, 0.0
  %v698 = vmax.f32 %v666, 0.0
  %v699 = vmax.f32 %v667, 0.0
  %v700 = vmax.f32 %v668, 0.0
  %v701 = vmax.f32 %v669, 0.0
  %v702 = vmax.f32 %v670, 0.0
  %v703 = vmax.f32 %v671, 0.0
  %v704 = vmax.f32 %v672, 0.0
  %v705 = vmax.f32 %v673, 0.0
  %v706 = vmax.f32 %v674, 0.0
  %v707 = vmax.f32 %v675, 0.0
  %v708 = vmax.f32 %v676, 0.0
  %v709 = vmax.f32 %v677, 0.0
  %v710 = vmax.f32 %v678, 0.0
  %v711 = vmax.f32 %v679, 0.0
  %v712 = vadd.f32 %v696, 1e-05
  %v713 = vadd.f32 %v697, 1e-05
  %v714 = vadd.f32 %v698, 1e-05
  %v715 = vadd.f32 %v699, 1e-05
  %v716 = vadd.f32 %v700, 1e-05
  %v717 = vadd.f32 %v701, 1e-05
  %v718 = vadd.f32 %v702, 1e-05
  %v719 = vadd.f32 %v703, 1e-05
  %v720 = vadd.f32 %v704, 1e-05
  %v721 = vadd.f32 %v705, 1e-05
  %v722 = vadd.f32 %v706, 1e-05
  %v723 = vadd.f32 %v707, 1e-05
  %v724 = vadd.f32 %v708, 1e-05
  %v725 = vadd.f32 %v709, 1e-05
  %v726 = vadd.f32 %v710, 1e-05
  %v727 = vadd.f32 %v711, 1e-05
  %v728 = vrsqrt.pop %v712
  %v729 = vrsqrt.pop %v713
  %v730 = vrsqrt.pop %v714
  %v731 = vrsqrt.pop %v715
  %v732 = vrsqrt.pop %v716
  %v733 = vrsqrt.pop %v717
  %v734 = vrsqrt.pop %v718
  %v735 = vrsqrt.pop %v719
  %v736 = vrsqrt.pop %v720
  %v737 = vrsqrt.pop %v721
  %v738 = vrsqrt.pop %v722
  %v739 = vrsqrt.pop %v723
  %v740 = vrsqrt.pop %v724
  %v741 = vrsqrt.pop %v725
  %v742 = vrsqrt.pop %v726
  %v743 = vrsqrt.pop %v727
  %v744 = vmul.f32 %v680, %v728
  %v745 = vmul.f32 %v681, %v729
  %v746 = vmul.f32 %v682, %v730
  %v747 = vmul.f32 %v683, %v731
  %v748 = vmul.f32 %v684, %v732
  %v749 = vmul.f32 %v685, %v733
  %v750 = vmul.f32 %v686, %v734
  %v751 = vmul.f32 %v687, %v735
  %v752 = vmul.f32 %v688, %v736
  %v753 = vmul.f32 %v689, %v737
  %v754 = vmul.f32 %v690, %v738
  %v755 = vmul.f32 %v691, %v739
  %v756 = vmul.f32 %v692, %v740
  %v757 = vmul.f32 %v693, %v741
  %v758 = vmul.f32 %v694, %v742
  %v759 = vmul.f32 %v695, %v743
  %v760 = vld [vmem:[%s7] sm:$0xff]
  %v761 = vld [vmem:[%s7 + $0x8] sm:$0xff]
  %v762 = vld [vmem:[%s7 + $0x10] sm:$0xff]
  %v763 = vld [vmem:[%s7 + $0x18] sm:$0xff]
  %v764 = vld [vmem:[%s7 + $0x20] sm:$0xff]
  %v765 = vld [vmem:[%s7 + $0x28] sm:$0xff]
  %v766 = vld [vmem:[%s7 + $0x30] sm:$0xff]
  %v767 = vld [vmem:[%s7 + $0x38] sm:$0xff]
  %v768 = vld [vmem:[%s7 + $0x40] sm:$0xff]
  %v769 = vld [vmem:[%s7 + $0x48] sm:$0xff]
  %v770 = vld [vmem:[%s7 + $0x50] sm:$0xff]
  %v771 = vld [vmem:[%s7 + $0x58] sm:$0xff]
  %v772 = vld [vmem:[%s7 + $0x60] sm:$0xff]
  %v773 = vld [vmem:[%s7 + $0x68] sm:$0xff]
  %v774 = vld [vmem:[%s7 + $0x70] sm:$0xff]
  %v775 = vld [vmem:[%s7 + $0x78] sm:$0xff]
  %v776 = vmul.f32 %v488, %v744
  %v777 = vmul.f32 %v489, %v745
  %v778 = vmul.f32 %v490, %v746
  %v779 = vmul.f32 %v491, %v747
  %v780 = vmul.f32 %v492, %v748
  %v781 = vmul.f32 %v493, %v749
  %v782 = vmul.f32 %v494, %v750
  %v783 = vmul.f32 %v495, %v751
  %v784 = vmul.f32 %v496, %v752
  %v785 = vmul.f32 %v497, %v753
  %v786 = vmul.f32 %v498, %v754
  %v787 = vmul.f32 %v499, %v755
  %v788 = vmul.f32 %v500, %v756
  %v789 = vmul.f32 %v501, %v757
  %v790 = vmul.f32 %v502, %v758
  %v791 = vmul.f32 %v503, %v759
  %v792 = vsub.f32 %v760, %v776
  %v793 = vsub.f32 %v761, %v777
  %v794 = vsub.f32 %v762, %v778
  %v795 = vsub.f32 %v763, %v779
  %v796 = vsub.f32 %v764, %v780
  %v797 = vsub.f32 %v765, %v781
  %v798 = vsub.f32 %v766, %v782
  %v799 = vsub.f32 %v767, %v783
  %v800 = vsub.f32 %v768, %v784
  %v801 = vsub.f32 %v769, %v785
  %v802 = vsub.f32 %v770, %v786
  %v803 = vsub.f32 %v771, %v787
  %v804 = vsub.f32 %v772, %v788
  %v805 = vsub.f32 %v773, %v789
  %v806 = vsub.f32 %v774, %v790
  %v807 = vsub.f32 %v775, %v791
  %809 = vset.pattern.permute.xlu0 0
  %810 = vperm.xlu0 %809, %v744
  %v811 = vpop.permute.xlu0 %810
  %814 = vset.pattern.permute.xlu0 0
  %815 = vperm.xlu0 %814, %v745
  %v816 = vpop.permute.xlu0 %815
  %819 = vset.pattern.permute.xlu0 0
  %820 = vperm.xlu0 %819, %v746
  %v821 = vpop.permute.xlu0 %820
  %824 = vset.pattern.permute.xlu0 0
  %825 = vperm.xlu0 %824, %v747
  %v826 = vpop.permute.xlu0 %825
  %829 = vset.pattern.permute.xlu0 0
  %830 = vperm.xlu0 %829, %v748
  %v831 = vpop.permute.xlu0 %830
  %834 = vset.pattern.permute.xlu0 0
  %835 = vperm.xlu0 %834, %v749
  %v836 = vpop.permute.xlu0 %835
  %839 = vset.pattern.permute.xlu0 0
  %840 = vperm.xlu0 %839, %v750
  %v841 = vpop.permute.xlu0 %840
  %844 = vset.pattern.permute.xlu0 0
  %845 = vperm.xlu0 %844, %v751
  %v846 = vpop.permute.xlu0 %845
  %849 = vset.pattern.permute.xlu0 0
  %850 = vperm.xlu0 %849, %v752
  %v851 = vpop.permute.xlu0 %850
  %854 = vset.pattern.permute.xlu0 0
  %855 = vperm.xlu0 %854, %v753
  %v856 = vpop.permute.xlu0 %855
  %859 = vset.pattern.permute.xlu0 0
  %860 = vperm.xlu0 %859, %v754
  %v861 = vpop.permute.xlu0 %860
  %864 = vset.pattern.permute.xlu0 0
  %865 = vperm.xlu0 %864, %v755
  %v866 = vpop.permute.xlu0 %865
  %869 = vset.pattern.permute.xlu0 0
  %870 = vperm.xlu0 %869, %v756
  %v871 = vpop.permute.xlu0 %870
  %874 = vset.pattern.permute.xlu0 0
  %875 = vperm.xlu0 %874, %v757
  %v876 = vpop.permute.xlu0 %875
  %879 = vset.pattern.permute.xlu0 0
  %880 = vperm.xlu0 %879, %v758
  %v881 = vpop.permute.xlu0 %880
  %884 = vset.pattern.permute.xlu0 0
  %885 = vperm.xlu0 %884, %v759
  %v886 = vpop.permute.xlu0 %885
  %v888 = vmul.f32 %v346, %v811
  %v889 = vmul.f32 %v348, %v811
  %v890 = vmul.f32 %v352, %v816
  %v891 = vmul.f32 %v354, %v816
  %v892 = vmul.f32 %v358, %v821
  %v893 = vmul.f32 %v360, %v821
  %v894 = vmul.f32 %v364, %v826
  %v895 = vmul.f32 %v366, %v826
  %v896 = vmul.f32 %v370, %v831
  %v897 = vmul.f32 %v372, %v831
  %v898 = vmul.f32 %v376, %v836
  %v899 = vmul.f32 %v378, %v836
  %v900 = vmul.f32 %v382, %v841
  %v901 = vmul.f32 %v384, %v841
  %v902 = vmul.f32 %v388, %v846
  %v903 = vmul.f32 %v390, %v846
  %v904 = vmul.f32 %v394, %v851
  %v905 = vmul.f32 %v396, %v851
  %v906 = vmul.f32 %v400, %v856
  %v907 = vmul.f32 %v402, %v856
  %v908 = vmul.f32 %v406, %v861
  %v909 = vmul.f32 %v408, %v861
  %v910 = vmul.f32 %v412, %v866
  %v911 = vmul.f32 %v414, %v866
  %v912 = vmul.f32 %v418, %v871
  %v913 = vmul.f32 %v420, %v871
  %v914 = vmul.f32 %v424, %v876
  %v915 = vmul.f32 %v426, %v876
  %v916 = vmul.f32 %v430, %v881
  %v917 = vmul.f32 %v432, %v881
  %v918 = vmul.f32 %v436, %v886
  %v919 = vmul.f32 %v438, %v886
  %921 = vset.pattern.permute.xlu0 0
  %922 = vperm.xlu0 %921, %v792
  %v923 = vpop.permute.xlu0 %922
  %926 = vset.pattern.permute.xlu0 0
  %927 = vperm.xlu0 %926, %v793
  %v928 = vpop.permute.xlu0 %927
  %931 = vset.pattern.permute.xlu0 0
  %932 = vperm.xlu0 %931, %v794
  %v933 = vpop.permute.xlu0 %932
  %936 = vset.pattern.permute.xlu0 0
  %937 = vperm.xlu0 %936, %v795
  %v938 = vpop.permute.xlu0 %937
  %941 = vset.pattern.permute.xlu0 0
  %942 = vperm.xlu0 %941, %v796
  %v943 = vpop.permute.xlu0 %942
  %946 = vset.pattern.permute.xlu0 0
  %947 = vperm.xlu0 %946, %v797
  %v948 = vpop.permute.xlu0 %947
  %951 = vset.pattern.permute.xlu0 0
  %952 = vperm.xlu0 %951, %v798
  %v953 = vpop.permute.xlu0 %952
  %956 = vset.pattern.permute.xlu0 0
  %957 = vperm.xlu0 %956, %v799
  %v958 = vpop.permute.xlu0 %957
  %961 = vset.pattern.permute.xlu0 0
  %962 = vperm.xlu0 %961, %v800
  %v963 = vpop.permute.xlu0 %962
  %966 = vset.pattern.permute.xlu0 0
  %967 = vperm.xlu0 %966, %v801
  %v968 = vpop.permute.xlu0 %967
  %971 = vset.pattern.permute.xlu0 0
  %972 = vperm.xlu0 %971, %v802
  %v973 = vpop.permute.xlu0 %972
  %976 = vset.pattern.permute.xlu0 0
  %977 = vperm.xlu0 %976, %v803
  %v978 = vpop.permute.xlu0 %977
  %981 = vset.pattern.permute.xlu0 0
  %982 = vperm.xlu0 %981, %v804
  %v983 = vpop.permute.xlu0 %982
  %986 = vset.pattern.permute.xlu0 0
  %987 = vperm.xlu0 %986, %v805
  %v988 = vpop.permute.xlu0 %987
  %991 = vset.pattern.permute.xlu0 0
  %992 = vperm.xlu0 %991, %v806
  %v993 = vpop.permute.xlu0 %992
  %996 = vset.pattern.permute.xlu0 0
  %997 = vperm.xlu0 %996, %v807
  %v998 = vpop.permute.xlu0 %997
  %v1000 = vadd.f32 %v888, %v923
  %v1001 = vadd.f32 %v889, %v923
  %v1002 = vadd.f32 %v890, %v928
  %v1003 = vadd.f32 %v891, %v928
  %v1004 = vadd.f32 %v892, %v933
  %v1005 = vadd.f32 %v893, %v933
  %v1006 = vadd.f32 %v894, %v938
  %v1007 = vadd.f32 %v895, %v938
  %v1008 = vadd.f32 %v896, %v943
  %v1009 = vadd.f32 %v897, %v943
  %v1010 = vadd.f32 %v898, %v948
  %v1011 = vadd.f32 %v899, %v948
  %v1012 = vadd.f32 %v900, %v953
  %v1013 = vadd.f32 %v901, %v953
  %v1014 = vadd.f32 %v902, %v958
  %v1015 = vadd.f32 %v903, %v958
  %v1016 = vadd.f32 %v904, %v963
  %v1017 = vadd.f32 %v905, %v963
  %v1018 = vadd.f32 %v906, %v968
  %v1019 = vadd.f32 %v907, %v968
  %v1020 = vadd.f32 %v908, %v973
  %v1021 = vadd.f32 %v909, %v973
  %v1022 = vadd.f32 %v910, %v978
  %v1023 = vadd.f32 %v911, %v978
  %v1024 = vadd.f32 %v912, %v983
  %v1025 = vadd.f32 %v913, %v983
  %v1026 = vadd.f32 %v914, %v988
  %v1027 = vadd.f32 %v915, %v988
  %v1028 = vadd.f32 %v916, %v993
  %v1029 = vadd.f32 %v917, %v993
  %v1030 = vadd.f32 %v918, %v998
  %v1031 = vadd.f32 %v919, %v998
  %v1032 = vpack.c.bf16 %v1002, %v1000
  %v1033 = vpack.c.bf16 %v1003, %v1001
  %v1034 = vpack.c.bf16 %v1006, %v1004
  %v1035 = vpack.c.bf16 %v1007, %v1005
  %v1036 = vpack.c.bf16 %v1010, %v1008
  %v1037 = vpack.c.bf16 %v1011, %v1009
  %v1038 = vpack.c.bf16 %v1014, %v1012
  %v1039 = vpack.c.bf16 %v1015, %v1013
  %v1040 = vpack.c.bf16 %v1018, %v1016
  %v1041 = vpack.c.bf16 %v1019, %v1017
  %v1042 = vpack.c.bf16 %v1022, %v1020
  %v1043 = vpack.c.bf16 %v1023, %v1021
  %v1044 = vpack.c.bf16 %v1026, %v1024
  %v1045 = vpack.c.bf16 %v1027, %v1025
  %v1046 = vpack.c.bf16 %v1030, %v1028
  %v1047 = vpack.c.bf16 %v1031, %v1029
  %v1064 = vunpack.c.l.b16 %v1032
  %v1065 = vunpack.c.l.b16 %v1033
  %v1066 = vunpack.c.h.b16 %v1032
  %v1067 = vunpack.c.h.b16 %v1033
  %v1068 = vunpack.c.l.b16 %v1034
  %v1069 = vunpack.c.l.b16 %v1035
  %v1070 = vunpack.c.h.b16 %v1034
  %v1071 = vunpack.c.h.b16 %v1035
  %v1072 = vunpack.c.l.b16 %v1036
  %v1073 = vunpack.c.l.b16 %v1037
  %v1074 = vunpack.c.h.b16 %v1036
  %v1075 = vunpack.c.h.b16 %v1037
  %v1076 = vunpack.c.l.b16 %v1038
  %v1077 = vunpack.c.l.b16 %v1039
  %v1078 = vunpack.c.h.b16 %v1038
  %v1079 = vunpack.c.h.b16 %v1039
  %v1080 = vunpack.c.l.b16 %v1040
  %v1081 = vunpack.c.l.b16 %v1041
  %v1082 = vunpack.c.h.b16 %v1040
  %v1083 = vunpack.c.h.b16 %v1041
  %v1084 = vunpack.c.l.b16 %v1042
  %v1085 = vunpack.c.l.b16 %v1043
  %v1086 = vunpack.c.h.b16 %v1042
  %v1087 = vunpack.c.h.b16 %v1043
  %v1088 = vunpack.c.l.b16 %v1044
  %v1089 = vunpack.c.l.b16 %v1045
  %v1090 = vunpack.c.h.b16 %v1044
  %v1091 = vunpack.c.h.b16 %v1045
  %v1092 = vunpack.c.l.b16 %v1046
  %v1093 = vunpack.c.l.b16 %v1047
  %v1094 = vunpack.c.h.b16 %v1046
  %v1095 = vunpack.c.h.b16 %v1047
  %v1096 = vpack.c.b16 %v1065, %v1064
  %v1097 = vpack.c.b16 %v1067, %v1066
  %v1098 = vpack.c.b16 %v1069, %v1068
  %v1099 = vpack.c.b16 %v1071, %v1070
  %v1100 = vpack.c.b16 %v1073, %v1072
  %v1101 = vpack.c.b16 %v1075, %v1074
  %v1102 = vpack.c.b16 %v1077, %v1076
  %v1103 = vpack.c.b16 %v1079, %v1078
  %v1104 = vpack.c.b16 %v1081, %v1080
  %v1105 = vpack.c.b16 %v1083, %v1082
  %v1106 = vpack.c.b16 %v1085, %v1084
  %v1107 = vpack.c.b16 %v1087, %v1086
  %v1108 = vpack.c.b16 %v1089, %v1088
  %v1109 = vpack.c.b16 %v1091, %v1090
  %v1110 = vpack.c.b16 %v1093, %v1092
  %v1111 = vpack.c.b16 %v1095, %v1094
  %1128 = vst [vmem:[%s9] sm:$0xff] %v1096
  %1129 = vst [vmem:[%s9 + $0x8] sm:$0xff] %v1097
  %1130 = vst [vmem:[%s9 + $0x10] sm:$0xff] %v1098
  %1131 = vst [vmem:[%s9 + $0x18] sm:$0xff] %v1099
  %1132 = vst [vmem:[%s9 + $0x20] sm:$0xff] %v1100
  %1133 = vst [vmem:[%s9 + $0x28] sm:$0xff] %v1101
  %1134 = vst [vmem:[%s9 + $0x30] sm:$0xff] %v1102
  %1135 = vst [vmem:[%s9 + $0x38] sm:$0xff] %v1103
  %1136 = vst [vmem:[%s9 + $0x40] sm:$0xff] %v1104
  %1137 = vst [vmem:[%s9 + $0x48] sm:$0xff] %v1105
  %1138 = vst [vmem:[%s9 + $0x50] sm:$0xff] %v1106
  %1139 = vst [vmem:[%s9 + $0x58] sm:$0xff] %v1107
  %1140 = vst [vmem:[%s9 + $0x60] sm:$0xff] %v1108
  %1141 = vst [vmem:[%s9 + $0x68] sm:$0xff] %v1109
  %1142 = vst [vmem:[%s9 + $0x70] sm:$0xff] %v1110
  %1143 = vst [vmem:[%s9 + $0x78] sm:$0xff] %v1111
  // Predicated region
  $region34: #{masked_attention_forward.3} parent=0 // pred_check
    _
  $region35: #{masked_attention_forward.3} parent=0 // pred_check_branch
    %1145 = sbr.rel (0) target = $region37
  $region36: #{masked_attention_forward.3} parent=0 // pred_region
    _
  $region37: #{masked_attention_forward.3} parent=0 // pred_fallthru
    _
  // Predicated region
  $region38: #{masked_attention_forward.3} parent=0 // pred_check
    _
  $region39: #{masked_attention_forward.3} parent=0 // pred_check_branch
    %1147 = sbr.rel (0) target = $region41
  $region40: #{masked_attention_forward.3} parent=0 // pred_region
    _
  $region41: #{masked_attention_forward.3} parent=0 // pred_fallthru
    _
  // Predicated region
  $region42: #{masked_attention_forward.3} parent=0 // pred_check
    _
  $region43: #{masked_attention_forward.3} parent=0 // pred_check_branch
    %1149 = sbr.rel (0) target = $region45
  $region44: #{masked_attention_forward.3} parent=0 // pred_region
    _
  $region45: #{masked_attention_forward.3} parent=0 // pred_fallthru
    _
  // Predicated region
  $region46: #{masked_attention_forward.3} parent=0 // pred_check
    _
  $region47: #{masked_attention_forward.3} parent=0 // pred_check_branch
    %1151 = sbr.rel (0) target = $region49
  $region48: #{masked_attention_forward.3} parent=0 // pred_region
    _
  $region49: #{masked_attention_forward.3} parent=0 // pred_fallthru
    _

</llo_original>
